<compile_context>
chip_gen: v5e
topology: v5e:2x2
jax: 0.10.0
libtpu: 0.0.40
codegen_flags: <defaults>
</compile_context>

<pallas_src>
import functools

import numpy as np
import jax
import jax.numpy as jnp
from jax import lax
from jax.experimental import pallas as pl
from jax.experimental.pallas import tpu as pltpu


def _round_up(x, m):
    return ((x + m - 1) // m) * m


def gru_kernel(x_ref, wih_ref, whh_ref, bcat_ref, bhn_ref, out_ref, gi_ref):
    """Single-layer GRU recurrence with hoisted input projection.

    x_ref:    (T*BP, D)    time-major, batch-padded, flattened input
    wih_ref:  (D, 3*HP)    gate-concatenated input weights  [r|z|n], lane-padded
    whh_ref:  (HP, 3*HP)   gate-concatenated hidden weights [r|z|n], lane-padded
    bcat_ref: (1, 3*HP)    folded biases: (b_ir+b_hr | b_iz+b_hz | b_in)
    bhn_ref:  (1, HP)      b_hn (applied inside r * (...))
    out_ref:  (BP, HP)     final hidden state h_T (padded)
    gi_ref:   (T*BP, 3*HP) VMEM scratch for the precomputed input projection
    """
    BP, HP = out_ref.shape
    T = x_ref.shape[0] // BP

    # --- hoisted input projection: one big MXU matmul, biases pre-folded -----
    gi_ref[...] = (
        jnp.dot(x_ref[...], wih_ref[...], preferred_element_type=jnp.float32)
        + bcat_ref[...]
    )

    w_hh = whh_ref[...]                                   # (HP, 3*HP)
    b_hn = jnp.broadcast_to(bhn_ref[...], (BP, HP))       # hoisted broadcast

    # --- step 0 peeled: h0 == 0 => h @ W_hh == 0, skip the matmul ------------
    gi0 = gi_ref[pl.ds(0, BP), :]                         # (BP, 3*HP)
    r0 = jax.nn.sigmoid(gi0[:, :HP])
    z0 = jax.nn.sigmoid(gi0[:, HP:2 * HP])
    n0 = jnp.tanh(gi0[:, 2 * HP:] + r0 * b_hn)
    h1 = (1.0 - z0) * n0                                  # + z0 * 0

    # --- serial recurrence: one matmul + elementwise per step ----------------
    def step(t, h):
        row = pl.multiple_of(t * BP, BP)
        gi = gi_ref[pl.ds(row, BP), :]                    # (BP, 3*HP)
        gh = jnp.dot(h, w_hh, preferred_element_type=jnp.float32)  # (BP, 3*HP)
        r = jax.nn.sigmoid(gi[:, :HP] + gh[:, :HP])
        z = jax.nn.sigmoid(gi[:, HP:2 * HP] + gh[:, HP:2 * HP])
        n = jnp.tanh(gi[:, 2 * HP:] + r * (gh[:, 2 * HP:] + b_hn))
        return (1.0 - z) * n + z * h

    h_T = lax.fori_loop(1, T, step, h1, unroll=True)      # T is static & tiny
    out_ref[...] = h_T


def prepare_gru_params(w_ih, w_hh, b_ih, b_hh):
    """One-time parameter repack (call at parameter-load time, not per forward).

    PyTorch GRU params: w_ih (3H, D), w_hh (3H, H), b_ih (3H,), b_hh (3H,),
    gate order [r, z, n].  Repacks to lane-padded, gate-concatenated matrices
    with biases folded where possible.
    """
    H = w_hh.shape[1]
    D = w_ih.shape[1]
    HP = _round_up(H, 128)                                # lane-dense gate blocks

    w_ih_g = jnp.transpose(w_ih.reshape(3, H, D), (0, 2, 1)).astype(jnp.float32)  # (3,D,H)
    w_hh_g = jnp.transpose(w_hh.reshape(3, H, H), (0, 2, 1)).astype(jnp.float32)  # (3,H,H)
    b_ih_g = b_ih.reshape(3, H).astype(jnp.float32)
    b_hh_g = b_hh.reshape(3, H).astype(jnp.float32)

    wih_cat = jnp.zeros((D, 3 * HP), jnp.float32)
    whh_cat = jnp.zeros((HP, 3 * HP), jnp.float32)
    bias_cat = jnp.zeros((1, 3 * HP), jnp.float32)
    bhn = jnp.zeros((1, HP), jnp.float32)

    for g in range(3):
        wih_cat = wih_cat.at[:, g * HP:g * HP + H].set(w_ih_g[g])
        whh_cat = whh_cat.at[:H, g * HP:g * HP + H].set(w_hh_g[g])

    # fold biases: r and z gates get b_i + b_h; n gate gets only b_in
    bias_cat = bias_cat.at[:, 0 * HP:0 * HP + H].set((b_ih_g[0] + b_hh_g[0])[None])
    bias_cat = bias_cat.at[:, 1 * HP:1 * HP + H].set((b_ih_g[1] + b_hh_g[1])[None])
    bias_cat = bias_cat.at[:, 2 * HP:2 * HP + H].set(b_ih_g[2][None])
    bhn = bhn.at[:, :H].set(b_hh_g[2][None])

    return {"wih_cat": wih_cat, "whh_cat": whh_cat, "bias_cat": bias_cat,
            "bhn": bhn, "H": H, "HP": HP}


@functools.partial(jax.jit, static_argnames=("H", "HP"))
def _forward_impl(x, wih_cat, whh_cat, bias_cat, bhn, *, H, HP):
    B, T, D = x.shape
    BP = _round_up(max(B, 8), 8)                          # sublane-dense batch

    # Layout glue (plain XLA, fused under jit): time-major, batch pad,
    # flatten (T, BP, D) -> (T*BP, D).
    x_tm = jnp.transpose(x, (1, 0, 2)).astype(jnp.float32)        # (T, B, D)
    if BP != B:
        x_tm = jnp.pad(x_tm, ((0, 0), (0, BP - B), (0, 0)))
    x_flat = x_tm.reshape(T * BP, D)

    vmem = pl.BlockSpec(memory_space=pltpu.MemorySpace.VMEM)
    out = pl.pallas_call(
        gru_kernel,
        out_shape=jax.ShapeDtypeStruct((BP, HP), jnp.float32),
        in_specs=[vmem, vmem, vmem, vmem, vmem],
        out_specs=vmem,
        scratch_shapes=[pltpu.VMEM((T * BP, 3 * HP), jnp.float32)],
    )(x_flat, wih_cat, whh_cat, bias_cat, bhn)

    return out[:B, :H]


def question_embedding_forward(x, params):
    """x: (B, T, D) batch-first (PyTorch convention). Returns (B, H) = output[:, -1]."""
    return _forward_impl(
        x, params["wih_cat"], params["whh_cat"], params["bias_cat"], params["bhn"],
        H=params["H"], HP=params["HP"])


def gru_reference(x, w_ih, w_hh, b_ih, b_hh):
    """Pure-JAX reference (PyTorch nn.GRU equations, h0 = 0)."""
    B, T, D = x.shape
    H = w_hh.shape[1]
    w_ir, w_iz, w_in = w_ih.reshape(3, H, D)
    w_hr, w_hz, w_hn = w_hh.reshape(3, H, H)
    b_ir, b_iz, b_in = b_ih.reshape(3, H)
    b_hr, b_hz, b_hn = b_hh.reshape(3, H)

    def step(h, x_t):
        r = jax.nn.sigmoid(x_t @ w_ir.T + b_ir + h @ w_hr.T + b_hr)
        z = jax.nn.sigmoid(x_t @ w_iz.T + b_iz + h @ w_hz.T + b_hz)
        n = jnp.tanh(x_t @ w_in.T + b_in + r * (h @ w_hn.T + b_hn))
        h_new = (1.0 - z) * n + z * h
        return h_new, None

    h0 = jnp.zeros((B, H), jnp.float32)
    h_T, _ = lax.scan(step, h0, jnp.transpose(x, (1, 0, 2)))
    return h_T


if __name__ == "__main__":
    # Module config: in_dim=32, num_hid=32, nlayers=1, bidirect=False, dropout=0, GRU.
    B, T, D, H = 2, 8, 32, 32

    key = jax.random.PRNGKey(0)
    kx, k1, k2, k3, k4 = jax.random.split(key, 5)

    # Deterministic param init mimicking PyTorch GRU init: U(-1/sqrt(H), 1/sqrt(H)).
    s = 1.0 / np.sqrt(H)
    w_ih = jax.random.uniform(k1, (3 * H, D), jnp.float32, -s, s)
    w_hh = jax.random.uniform(k2, (3 * H, H), jnp.float32, -s, s)
    b_ih = jax.random.uniform(k3, (3 * H,), jnp.float32, -s, s)
    b_hh = jax.random.uniform(k4, (3 * H,), jnp.float32, -s, s)

    x = jax.random.normal(kx, (B, T, D), jnp.float32)

    # Parameter repack happens once, outside the per-forward path.
    params = jax.tree_util.tree_map(
        lambda a: jax.block_until_ready(a) if isinstance(a, jax.Array) else a,
        prepare_gru_params(w_ih, w_hh, b_ih, b_hh),
    )

    out = question_embedding_forward(x, params)
    out = jax.block_until_ready(out)

    ref = jax.block_until_ready(gru_reference(x, w_ih, w_hh, b_ih, b_hh))
    np.testing.assert_allclose(np.asarray(out), np.asarray(ref), rtol=1e-5, atol=1e-5)

    assert out.shape == (B, H)
    print("KERNEL_OK")
</pallas_src>

<mosaic_0001>
module attributes {stable_mosaic.version = 11 : i64} {
  func.func @gru_kernel(%arg0: memref<64x32xf32, #tpu.memory_space<vmem>>, %arg1: memref<32x384xf32, #tpu.memory_space<vmem>>, %arg2: memref<128x384xf32, #tpu.memory_space<vmem>>, %arg3: memref<1x384xf32, #tpu.memory_space<vmem>>, %arg4: memref<1x128xf32, #tpu.memory_space<vmem>>, %arg5: memref<8x128xf32, #tpu.memory_space<vmem>>, %arg6: memref<64x384xf32, #tpu.memory_space<vmem>>) attributes {dimension_semantics = [], scalar_prefetch = 0 : i64, scratch_operands = 1 : i64, tpu.core_type = #tpu.core_type<tc>} {
    %c0 = arith.constant 0 : index
    %c0_0 = arith.constant 0 : index
    %0 = vector.load %arg0[%c0, %c0_0] : memref<64x32xf32, #tpu.memory_space<vmem>>, vector<64x32xf32>
    %c0_1 = arith.constant 0 : index
    %c0_2 = arith.constant 0 : index
    %1 = vector.load %arg1[%c0_1, %c0_2] : memref<32x384xf32, #tpu.memory_space<vmem>>, vector<32x384xf32>
    %cst = arith.constant dense<0.000000e+00> : vector<64x384xf32>
    %2 = tpu.matmul %0, %1, %cst {dimension_numbers = #tpu.dot_dimension_numbers<[1], [0], [0], [1], [0, 0, 1, 1], [], []>} : vector<64x32xf32>, vector<32x384xf32>, vector<64x384xf32> -> vector<64x384xf32>
    %c0_3 = arith.constant 0 : index
    %c0_4 = arith.constant 0 : index
    %3 = vector.load %arg3[%c0_3, %c0_4] : memref<1x384xf32, #tpu.memory_space<vmem>>, vector<1x384xf32>
    %4 = vector.broadcast %3 : vector<1x384xf32> to vector<64x384xf32>
    %5 = arith.addf %2, %4 : vector<64x384xf32>
    %c0_5 = arith.constant 0 : index
    %c0_6 = arith.constant 0 : index
    %6 = vector.load %arg6[%c0_5, %c0_6] : memref<64x384xf32, #tpu.memory_space<vmem>>, vector<64x384xf32>
    tpu.vector_store %arg6[%c0_5, %c0_6], %5 {strides = array<i32>} : memref<64x384xf32, #tpu.memory_space<vmem>>, vector<64x384xf32>,
    %c0_7 = arith.constant 0 : index
    %c0_8 = arith.constant 0 : index
    %7 = vector.load %arg2[%c0_7, %c0_8] : memref<128x384xf32, #tpu.memory_space<vmem>>, vector<128x384xf32>
    %c0_9 = arith.constant 0 : index
    %c0_10 = arith.constant 0 : index
    %8 = vector.load %arg4[%c0_9, %c0_10] : memref<1x128xf32, #tpu.memory_space<vmem>>, vector<1x128xf32>
    %9 = vector.shape_cast %8 : vector<1x128xf32> to vector<1x128xf32>
    %10 = vector.broadcast %9 : vector<1x128xf32> to vector<8x128xf32>
    %c0_11 = arith.constant 0 : index
    %c0_12 = arith.constant 0 : index
    %11 = vector.load %arg6[%c0_11, %c0_12] : memref<64x384xf32, #tpu.memory_space<vmem>>, vector<8x384xf32>
    %12 = vector.extract_strided_slice %11 {offsets = [0, 0], sizes = [8, 128], strides = [1, 1]} : vector<8x384xf32> to vector<8x128xf32>
    %13 = arith.negf %12 : vector<8x128xf32>
    %14 = math.exp %13 : vector<8x128xf32>
    %cst_13 = arith.constant 1.000000e+00 : f32
    %15 = vector.broadcast %cst_13 : f32 to vector<8x128xf32>
    %16 = arith.addf %15, %14 : vector<8x128xf32>
    %17 = arith.divf %15, %16 : vector<8x128xf32>
    %18 = vector.extract_strided_slice %11 {offsets = [0, 128], sizes = [8, 128], strides = [1, 1]} : vector<8x384xf32> to vector<8x128xf32>
    %19 = arith.negf %18 : vector<8x128xf32>
    %20 = math.exp %19 : vector<8x128xf32>
    %cst_14 = arith.constant 1.000000e+00 : f32
    %21 = vector.broadcast %cst_14 : f32 to vector<8x128xf32>
    %22 = arith.addf %21, %20 : vector<8x128xf32>
    %23 = arith.divf %21, %22 : vector<8x128xf32>
    %24 = vector.extract_strided_slice %11 {offsets = [0, 256], sizes = [8, 128], strides = [1, 1]} : vector<8x384xf32> to vector<8x128xf32>
    %25 = arith.mulf %17, %10 : vector<8x128xf32>
    %26 = arith.addf %24, %25 : vector<8x128xf32>
    %27 = math.tanh %26 : vector<8x128xf32>
    %cst_15 = arith.constant 1.000000e+00 : f32
    %28 = vector.broadcast %cst_15 : f32 to vector<8x128xf32>
    %29 = arith.subf %28, %23 : vector<8x128xf32>
    %30 = arith.mulf %29, %27 : vector<8x128xf32>
    %c1_i32 = arith.constant 1 : i32
    %c8_i32 = arith.constant 8 : i32
    %31 = arith.muli %c1_i32, %c8_i32 : i32
    %32 = tpu.assume_multiple %31, 8 : i32
    %33 = arith.index_cast %32 : i32 to index
    %c0_16 = arith.constant 0 : index
    %34 = vector.load %arg6[%33, %c0_16] : memref<64x384xf32, #tpu.memory_space<vmem>>, vector<8x384xf32>
    %cst_17 = arith.constant dense<0.000000e+00> : vector<8x384xf32>
    %35 = tpu.matmul %30, %7, %cst_17 {dimension_numbers = #tpu.dot_dimension_numbers<[1], [0], [0], [1], [0, 0, 1, 1], [], []>} : vector<8x128xf32>, vector<128x384xf32>, vector<8x384xf32> -> vector<8x384xf32>
    %36 = vector.extract_strided_slice %34 {offsets = [0, 0], sizes = [8, 128], strides = [1, 1]} : vector<8x384xf32> to vector<8x128xf32>
    %37 = vector.extract_strided_slice %35 {offsets = [0, 0], sizes = [8, 128], strides = [1, 1]} : vector<8x384xf32> to vector<8x128xf32>
    %38 = arith.addf %36, %37 : vector<8x128xf32>
    %39 = arith.negf %38 : vector<8x128xf32>
    %40 = math.exp %39 : vector<8x128xf32>
    %cst_18 = arith.constant 1.000000e+00 : f32
    %41 = vector.broadcast %cst_18 : f32 to vector<8x128xf32>
    %42 = arith.addf %41, %40 : vector<8x128xf32>
    %43 = arith.divf %41, %42 : vector<8x128xf32>
    %44 = vector.extract_strided_slice %34 {offsets = [0, 128], sizes = [8, 128], strides = [1, 1]} : vector<8x384xf32> to vector<8x128xf32>
    %45 = vector.extract_strided_slice %35 {offsets = [0, 128], sizes = [8, 128], strides = [1, 1]} : vector<8x384xf32> to vector<8x128xf32>
    %46 = arith.addf %44, %45 : vector<8x128xf32>
    %47 = arith.negf %46 : vector<8x128xf32>
    %48 = math.exp %47 : vector<8x128xf32>
    %cst_19 = arith.constant 1.000000e+00 : f32
    %49 = vector.broadcast %cst_19 : f32 to vector<8x128xf32>
    %50 = arith.addf %49, %48 : vector<8x128xf32>
    %51 = arith.divf %49, %50 : vector<8x128xf32>
    %52 = vector.extract_strided_slice %34 {offsets = [0, 256], sizes = [8, 128], strides = [1, 1]} : vector<8x384xf32> to vector<8x128xf32>
    %53 = vector.extract_strided_slice %35 {offsets = [0, 256], sizes = [8, 128], strides = [1, 1]} : vector<8x384xf32> to vector<8x128xf32>
    %54 = arith.addf %53, %10 : vector<8x128xf32>
    %55 = arith.mulf %43, %54 : vector<8x128xf32>
    %56 = arith.addf %52, %55 : vector<8x128xf32>
    %57 = math.tanh %56 : vector<8x128xf32>
    %cst_20 = arith.constant 1.000000e+00 : f32
    %58 = vector.broadcast %cst_20 : f32 to vector<8x128xf32>
    %59 = arith.subf %58, %51 : vector<8x128xf32>
    %60 = arith.mulf %59, %57 : vector<8x128xf32>
    %61 = arith.mulf %51, %30 : vector<8x128xf32>
    %62 = arith.addf %60, %61 : vector<8x128xf32>
    %c2_i32 = arith.constant 2 : i32
    %c8_i32_21 = arith.constant 8 : i32
    %63 = arith.muli %c2_i32, %c8_i32_21 : i32
    %64 = tpu.assume_multiple %63, 8 : i32
    %65 = arith.index_cast %64 : i32 to index
    %c0_22 = arith.constant 0 : index
    %66 = vector.load %arg6[%65, %c0_22] : memref<64x384xf32, #tpu.memory_space<vmem>>, vector<8x384xf32>
    %cst_23 = arith.constant dense<0.000000e+00> : vector<8x384xf32>
    %67 = tpu.matmul %62, %7, %cst_23 {dimension_numbers = #tpu.dot_dimension_numbers<[1], [0], [0], [1], [0, 0, 1, 1], [], []>} : vector<8x128xf32>, vector<128x384xf32>, vector<8x384xf32> -> vector<8x384xf32>
    %68 = vector.extract_strided_slice %66 {offsets = [0, 0], sizes = [8, 128], strides = [1, 1]} : vector<8x384xf32> to vector<8x128xf32>
    %69 = vector.extract_strided_slice %67 {offsets = [0, 0], sizes = [8, 128], strides = [1, 1]} : vector<8x384xf32> to vector<8x128xf32>
    %70 = arith.addf %68, %69 : vector<8x128xf32>
    %71 = arith.negf %70 : vector<8x128xf32>
    %72 = math.exp %71 : vector<8x128xf32>
    %cst_24 = arith.constant 1.000000e+00 : f32
    %73 = vector.broadcast %cst_24 : f32 to vector<8x128xf32>
    %74 = arith.addf %73, %72 : vector<8x128xf32>
    %75 = arith.divf %73, %74 : vector<8x128xf32>
    %76 = vector.extract_strided_slice %66 {offsets = [0, 128], sizes = [8, 128], strides = [1, 1]} : vector<8x384xf32> to vector<8x128xf32>
    %77 = vector.extract_strided_slice %67 {offsets = [0, 128], sizes = [8, 128], strides = [1, 1]} : vector<8x384xf32> to vector<8x128xf32>
    %78 = arith.addf %76, %77 : vector<8x128xf32>
    %79 = arith.negf %78 : vector<8x128xf32>
    %80 = math.exp %79 : vector<8x128xf32>
    %cst_25 = arith.constant 1.000000e+00 : f32
    %81 = vector.broadcast %cst_25 : f32 to vector<8x128xf32>
    %82 = arith.addf %81, %80 : vector<8x128xf32>
    %83 = arith.divf %81, %82 : vector<8x128xf32>
    %84 = vector.extract_strided_slice %66 {offsets = [0, 256], sizes = [8, 128], strides = [1, 1]} : vector<8x384xf32> to vector<8x128xf32>
    %85 = vector.extract_strided_slice %67 {offsets = [0, 256], sizes = [8, 128], strides = [1, 1]} : vector<8x384xf32> to vector<8x128xf32>
    %86 = arith.addf %85, %10 : vector<8x128xf32>
    %87 = arith.mulf %75, %86 : vector<8x128xf32>
    %88 = arith.addf %84, %87 : vector<8x128xf32>
    %89 = math.tanh %88 : vector<8x128xf32>
    %cst_26 = arith.constant 1.000000e+00 : f32
    %90 = vector.broadcast %cst_26 : f32 to vector<8x128xf32>
    %91 = arith.subf %90, %83 : vector<8x128xf32>
    %92 = arith.mulf %91, %89 : vector<8x128xf32>
    %93 = arith.mulf %83, %62 : vector<8x128xf32>
    %94 = arith.addf %92, %93 : vector<8x128xf32>
    %c3_i32 = arith.constant 3 : i32
    %c8_i32_27 = arith.constant 8 : i32
    %95 = arith.muli %c3_i32, %c8_i32_27 : i32
    %96 = tpu.assume_multiple %95, 8 : i32
    %97 = arith.index_cast %96 : i32 to index
    %c0_28 = arith.constant 0 : index
    %98 = vector.load %arg6[%97, %c0_28] : memref<64x384xf32, #tpu.memory_space<vmem>>, vector<8x384xf32>
    %cst_29 = arith.constant dense<0.000000e+00> : vector<8x384xf32>
    %99 = tpu.matmul %94, %7, %cst_29 {dimension_numbers = #tpu.dot_dimension_numbers<[1], [0], [0], [1], [0, 0, 1, 1], [], []>} : vector<8x128xf32>, vector<128x384xf32>, vector<8x384xf32> -> vector<8x384xf32>
    %100 = vector.extract_strided_slice %98 {offsets = [0, 0], sizes = [8, 128], strides = [1, 1]} : vector<8x384xf32> to vector<8x128xf32>
    %101 = vector.extract_strided_slice %99 {offsets = [0, 0], sizes = [8, 128], strides = [1, 1]} : vector<8x384xf32> to vector<8x128xf32>
    %102 = arith.addf %100, %101 : vector<8x128xf32>
    %103 = arith.negf %102 : vector<8x128xf32>
    %104 = math.exp %103 : vector<8x128xf32>
    %cst_30 = arith.constant 1.000000e+00 : f32
    %105 = vector.broadcast %cst_30 : f32 to vector<8x128xf32>
    %106 = arith.addf %105, %104 : vector<8x128xf32>
    %107 = arith.divf %105, %106 : vector<8x128xf32>
    %108 = vector.extract_strided_slice %98 {offsets = [0, 128], sizes = [8, 128], strides = [1, 1]} : vector<8x384xf32> to vector<8x128xf32>
    %109 = vector.extract_strided_slice %99 {offsets = [0, 128], sizes = [8, 128], strides = [1, 1]} : vector<8x384xf32> to vector<8x128xf32>
    %110 = arith.addf %108, %109 : vector<8x128xf32>
    %111 = arith.negf %110 : vector<8x128xf32>
    %112 = math.exp %111 : vector<8x128xf32>
    %cst_31 = arith.constant 1.000000e+00 : f32
    %113 = vector.broadcast %cst_31 : f32 to vector<8x128xf32>
    %114 = arith.addf %113, %112 : vector<8x128xf32>
    %115 = arith.divf %113, %114 : vector<8x128xf32>
    %116 = vector.extract_strided_slice %98 {offsets = [0, 256], sizes = [8, 128], strides = [1, 1]} : vector<8x384xf32> to vector<8x128xf32>
    %117 = vector.extract_strided_slice %99 {offsets = [0, 256], sizes = [8, 128], strides = [1, 1]} : vector<8x384xf32> to vector<8x128xf32>
    %118 = arith.addf %117, %10 : vector<8x128xf32>
    %119 = arith.mulf %107, %118 : vector<8x128xf32>
    %120 = arith.addf %116, %119 : vector<8x128xf32>
    %121 = math.tanh %120 : vector<8x128xf32>
    %cst_32 = arith.constant 1.000000e+00 : f32
    %122 = vector.broadcast %cst_32 : f32 to vector<8x128xf32>
    %123 = arith.subf %122, %115 : vector<8x128xf32>
    %124 = arith.mulf %123, %121 : vector<8x128xf32>
    %125 = arith.mulf %115, %94 : vector<8x128xf32>
    %126 = arith.addf %124, %125 : vector<8x128xf32>
    %c4_i32 = arith.constant 4 : i32
    %c8_i32_33 = arith.constant 8 : i32
    %127 = arith.muli %c4_i32, %c8_i32_33 : i32
    %128 = tpu.assume_multiple %127, 8 : i32
    %129 = arith.index_cast %128 : i32 to index
    %c0_34 = arith.constant 0 : index
    %130 = vector.load %arg6[%129, %c0_34] : memref<64x384xf32, #tpu.memory_space<vmem>>, vector<8x384xf32>
    %cst_35 = arith.constant dense<0.000000e+00> : vector<8x384xf32>
    %131 = tpu.matmul %126, %7, %cst_35 {dimension_numbers = #tpu.dot_dimension_numbers<[1], [0], [0], [1], [0, 0, 1, 1], [], []>} : vector<8x128xf32>, vector<128x384xf32>, vector<8x384xf32> -> vector<8x384xf32>
    %132 = vector.extract_strided_slice %130 {offsets = [0, 0], sizes = [8, 128], strides = [1, 1]} : vector<8x384xf32> to vector<8x128xf32>
    %133 = vector.extract_strided_slice %131 {offsets = [0, 0], sizes = [8, 128], strides = [1, 1]} : vector<8x384xf32> to vector<8x128xf32>
    %134 = arith.addf %132, %133 : vector<8x128xf32>
    %135 = arith.negf %134 : vector<8x128xf32>
    %136 = math.exp %135 : vector<8x128xf32>
    %cst_36 = arith.constant 1.000000e+00 : f32
    %137 = vector.broadcast %cst_36 : f32 to vector<8x128xf32>
    %138 = arith.addf %137, %136 : vector<8x128xf32>
    %139 = arith.divf %137, %138 : vector<8x128xf32>
    %140 = vector.extract_strided_slice %130 {offsets = [0, 128], sizes = [8, 128], strides = [1, 1]} : vector<8x384xf32> to vector<8x128xf32>
    %141 = vector.extract_strided_slice %131 {offsets = [0, 128], sizes = [8, 128], strides = [1, 1]} : vector<8x384xf32> to vector<8x128xf32>
    %142 = arith.addf %140, %141 : vector<8x128xf32>
    %143 = arith.negf %142 : vector<8x128xf32>
    %144 = math.exp %143 : vector<8x128xf32>
    %cst_37 = arith.constant 1.000000e+00 : f32
    %145 = vector.broadcast %cst_37 : f32 to vector<8x128xf32>
    %146 = arith.addf %145, %144 : vector<8x128xf32>
    %147 = arith.divf %145, %146 : vector<8x128xf32>
    %148 = vector.extract_strided_slice %130 {offsets = [0, 256], sizes = [8, 128], strides = [1, 1]} : vector<8x384xf32> to vector<8x128xf32>
    %149 = vector.extract_strided_slice %131 {offsets = [0, 256], sizes = [8, 128], strides = [1, 1]} : vector<8x384xf32> to vector<8x128xf32>
    %150 = arith.addf %149, %10 : vector<8x128xf32>
    %151 = arith.mulf %139, %150 : vector<8x128xf32>
    %152 = arith.addf %148, %151 : vector<8x128xf32>
    %153 = math.tanh %152 : vector<8x128xf32>
    %cst_38 = arith.constant 1.000000e+00 : f32
    %154 = vector.broadcast %cst_38 : f32 to vector<8x128xf32>
    %155 = arith.subf %154, %147 : vector<8x128xf32>
    %156 = arith.mulf %155, %153 : vector<8x128xf32>
    %157 = arith.mulf %147, %126 : vector<8x128xf32>
    %158 = arith.addf %156, %157 : vector<8x128xf32>
    %c5_i32 = arith.constant 5 : i32
    %c8_i32_39 = arith.constant 8 : i32
    %159 = arith.muli %c5_i32, %c8_i32_39 : i32
    %160 = tpu.assume_multiple %159, 8 : i32
    %161 = arith.index_cast %160 : i32 to index
    %c0_40 = arith.constant 0 : index
    %162 = vector.load %arg6[%161, %c0_40] : memref<64x384xf32, #tpu.memory_space<vmem>>, vector<8x384xf32>
    %cst_41 = arith.constant dense<0.000000e+00> : vector<8x384xf32>
    %163 = tpu.matmul %158, %7, %cst_41 {dimension_numbers = #tpu.dot_dimension_numbers<[1], [0], [0], [1], [0, 0, 1, 1], [], []>} : vector<8x128xf32>, vector<128x384xf32>, vector<8x384xf32> -> vector<8x384xf32>
    %164 = vector.extract_strided_slice %162 {offsets = [0, 0], sizes = [8, 128], strides = [1, 1]} : vector<8x384xf32> to vector<8x128xf32>
    %165 = vector.extract_strided_slice %163 {offsets = [0, 0], sizes = [8, 128], strides = [1, 1]} : vector<8x384xf32> to vector<8x128xf32>
    %166 = arith.addf %164, %165 : vector<8x128xf32>
    %167 = arith.negf %166 : vector<8x128xf32>
    %168 = math.exp %167 : vector<8x128xf32>
    %cst_42 = arith.constant 1.000000e+00 : f32
    %169 = vector.broadcast %cst_42 : f32 to vector<8x128xf32>
    %170 = arith.addf %169, %168 : vector<8x128xf32>
    %171 = arith.divf %169, %170 : vector<8x128xf32>
    %172 = vector.extract_strided_slice %162 {offsets = [0, 128], sizes = [8, 128], strides = [1, 1]} : vector<8x384xf32> to vector<8x128xf32>
    %173 = vector.extract_strided_slice %163 {offsets = [0, 128], sizes = [8, 128], strides = [1, 1]} : vector<8x384xf32> to vector<8x128xf32>
    %174 = arith.addf %172, %173 : vector<8x128xf32>
    %175 = arith.negf %174 : vector<8x128xf32>
    %176 = math.exp %175 : vector<8x128xf32>
    %cst_43 = arith.constant 1.000000e+00 : f32
    %177 = vector.broadcast %cst_43 : f32 to vector<8x128xf32>
    %178 = arith.addf %177, %176 : vector<8x128xf32>
    %179 = arith.divf %177, %178 : vector<8x128xf32>
    %180 = vector.extract_strided_slice %162 {offsets = [0, 256], sizes = [8, 128], strides = [1, 1]} : vector<8x384xf32> to vector<8x128xf32>
    %181 = vector.extract_strided_slice %163 {offsets = [0, 256], sizes = [8, 128], strides = [1, 1]} : vector<8x384xf32> to vector<8x128xf32>
    %182 = arith.addf %181, %10 : vector<8x128xf32>
    %183 = arith.mulf %171, %182 : vector<8x128xf32>
    %184 = arith.addf %180, %183 : vector<8x128xf32>
    %185 = math.tanh %184 : vector<8x128xf32>
    %cst_44 = arith.constant 1.000000e+00 : f32
    %186 = vector.broadcast %cst_44 : f32 to vector<8x128xf32>
    %187 = arith.subf %186, %179 : vector<8x128xf32>
    %188 = arith.mulf %187, %185 : vector<8x128xf32>
    %189 = arith.mulf %179, %158 : vector<8x128xf32>
    %190 = arith.addf %188, %189 : vector<8x128xf32>
    %c6_i32 = arith.constant 6 : i32
    %c8_i32_45 = arith.constant 8 : i32
    %191 = arith.muli %c6_i32, %c8_i32_45 : i32
    %192 = tpu.assume_multiple %191, 8 : i32
    %193 = arith.index_cast %192 : i32 to index
    %c0_46 = arith.constant 0 : index
    %194 = vector.load %arg6[%193, %c0_46] : memref<64x384xf32, #tpu.memory_space<vmem>>, vector<8x384xf32>
    %cst_47 = arith.constant dense<0.000000e+00> : vector<8x384xf32>
    %195 = tpu.matmul %190, %7, %cst_47 {dimension_numbers = #tpu.dot_dimension_numbers<[1], [0], [0], [1], [0, 0, 1, 1], [], []>} : vector<8x128xf32>, vector<128x384xf32>, vector<8x384xf32> -> vector<8x384xf32>
    %196 = vector.extract_strided_slice %194 {offsets = [0, 0], sizes = [8, 128], strides = [1, 1]} : vector<8x384xf32> to vector<8x128xf32>
    %197 = vector.extract_strided_slice %195 {offsets = [0, 0], sizes = [8, 128], strides = [1, 1]} : vector<8x384xf32> to vector<8x128xf32>
    %198 = arith.addf %196, %197 : vector<8x128xf32>
    %199 = arith.negf %198 : vector<8x128xf32>
    %200 = math.exp %199 : vector<8x128xf32>
    %cst_48 = arith.constant 1.000000e+00 : f32
    %201 = vector.broadcast %cst_48 : f32 to vector<8x128xf32>
    %202 = arith.addf %201, %200 : vector<8x128xf32>
    %203 = arith.divf %201, %202 : vector<8x128xf32>
    %204 = vector.extract_strided_slice %194 {offsets = [0, 128], sizes = [8, 128], strides = [1, 1]} : vector<8x384xf32> to vector<8x128xf32>
    %205 = vector.extract_strided_slice %195 {offsets = [0, 128], sizes = [8, 128], strides = [1, 1]} : vector<8x384xf32> to vector<8x128xf32>
    %206 = arith.addf %204, %205 : vector<8x128xf32>
    %207 = arith.negf %206 : vector<8x128xf32>
    %208 = math.exp %207 : vector<8x128xf32>
    %cst_49 = arith.constant 1.000000e+00 : f32
    %209 = vector.broadcast %cst_49 : f32 to vector<8x128xf32>
    %210 = arith.addf %209, %208 : vector<8x128xf32>
    %211 = arith.divf %209, %210 : vector<8x128xf32>
    %212 = vector.extract_strided_slice %194 {offsets = [0, 256], sizes = [8, 128], strides = [1, 1]} : vector<8x384xf32> to vector<8x128xf32>
    %213 = vector.extract_strided_slice %195 {offsets = [0, 256], sizes = [8, 128], strides = [1, 1]} : vector<8x384xf32> to vector<8x128xf32>
    %214 = arith.addf %213, %10 : vector<8x128xf32>
    %215 = arith.mulf %203, %214 : vector<8x128xf32>
    %216 = arith.addf %212, %215 : vector<8x128xf32>
    %217 = math.tanh %216 : vector<8x128xf32>
    %cst_50 = arith.constant 1.000000e+00 : f32
    %218 = vector.broadcast %cst_50 : f32 to vector<8x128xf32>
    %219 = arith.subf %218, %211 : vector<8x128xf32>
    %220 = arith.mulf %219, %217 : vector<8x128xf32>
    %221 = arith.mulf %211, %190 : vector<8x128xf32>
    %222 = arith.addf %220, %221 : vector<8x128xf32>
    %c7_i32 = arith.constant 7 : i32
    %c8_i32_51 = arith.constant 8 : i32
    %223 = arith.muli %c7_i32, %c8_i32_51 : i32
    %224 = tpu.assume_multiple %223, 8 : i32
    %225 = arith.index_cast %224 : i32 to index
    %c0_52 = arith.constant 0 : index
    %226 = vector.load %arg6[%225, %c0_52] : memref<64x384xf32, #tpu.memory_space<vmem>>, vector<8x384xf32>
    %cst_53 = arith.constant dense<0.000000e+00> : vector<8x384xf32>
    %227 = tpu.matmul %222, %7, %cst_53 {dimension_numbers = #tpu.dot_dimension_numbers<[1], [0], [0], [1], [0, 0, 1, 1], [], []>} : vector<8x128xf32>, vector<128x384xf32>, vector<8x384xf32> -> vector<8x384xf32>
    %228 = vector.extract_strided_slice %226 {offsets = [0, 0], sizes = [8, 128], strides = [1, 1]} : vector<8x384xf32> to vector<8x128xf32>
    %229 = vector.extract_strided_slice %227 {offsets = [0, 0], sizes = [8, 128], strides = [1, 1]} : vector<8x384xf32> to vector<8x128xf32>
    %230 = arith.addf %228, %229 : vector<8x128xf32>
    %231 = arith.negf %230 : vector<8x128xf32>
    %232 = math.exp %231 : vector<8x128xf32>
    %cst_54 = arith.constant 1.000000e+00 : f32
    %233 = vector.broadcast %cst_54 : f32 to vector<8x128xf32>
    %234 = arith.addf %233, %232 : vector<8x128xf32>
    %235 = arith.divf %233, %234 : vector<8x128xf32>
    %236 = vector.extract_strided_slice %226 {offsets = [0, 128], sizes = [8, 128], strides = [1, 1]} : vector<8x384xf32> to vector<8x128xf32>
    %237 = vector.extract_strided_slice %227 {offsets = [0, 128], sizes = [8, 128], strides = [1, 1]} : vector<8x384xf32> to vector<8x128xf32>
    %238 = arith.addf %236, %237 : vector<8x128xf32>
    %239 = arith.negf %238 : vector<8x128xf32>
    %240 = math.exp %239 : vector<8x128xf32>
    %cst_55 = arith.constant 1.000000e+00 : f32
    %241 = vector.broadcast %cst_55 : f32 to vector<8x128xf32>
    %242 = arith.addf %241, %240 : vector<8x128xf32>
    %243 = arith.divf %241, %242 : vector<8x128xf32>
    %244 = vector.extract_strided_slice %226 {offsets = [0, 256], sizes = [8, 128], strides = [1, 1]} : vector<8x384xf32> to vector<8x128xf32>
    %245 = vector.extract_strided_slice %227 {offsets = [0, 256], sizes = [8, 128], strides = [1, 1]} : vector<8x384xf32> to vector<8x128xf32>
    %246 = arith.addf %245, %10 : vector<8x128xf32>
    %247 = arith.mulf %235, %246 : vector<8x128xf32>
    %248 = arith.addf %244, %247 : vector<8x128xf32>
    %249 = math.tanh %248 : vector<8x128xf32>
    %cst_56 = arith.constant 1.000000e+00 : f32
    %250 = vector.broadcast %cst_56 : f32 to vector<8x128xf32>
    %251 = arith.subf %250, %243 : vector<8x128xf32>
    %252 = arith.mulf %251, %249 : vector<8x128xf32>
    %253 = arith.mulf %243, %222 : vector<8x128xf32>
    %254 = arith.addf %252, %253 : vector<8x128xf32>
    %c7_i32_57 = arith.constant 7 : i32
    %c0_58 = arith.constant 0 : index
    %c0_59 = arith.constant 0 : index
    %255 = vector.load %arg5[%c0_58, %c0_59] : memref<8x128xf32, #tpu.memory_space<vmem>>, vector<8x128xf32>
    tpu.vector_store %arg5[%c0_58, %c0_59], %254 {strides = array<i32>} : memref<8x128xf32, #tpu.memory_space<vmem>>, vector<8x128xf32>,
    return
  }
}

</mosaic_0001>

<llo_original>
// kernel: _forward_impl.1
$region0: #{_forward_impl.1}
  #allocation0 [shape = 'u32[]', space=smem, size = 0x4, offset = 0x4, fixed_abs, tag = 'smem constant byte address 0x4 - core index']
  #allocation1 [shape = 'u32[72,128]{1,0:T(1,128)}', space=vmem, size = 0x9000, scoped, tag = 'internal scratch']
  #allocation2 [shape = 'f32[64,384]{1,0:T(8,128)}', space=vmem, size = 0x18000, scoped, tag = 'scratch operand']
  %s0 = inlined_call_operand.vmem [shape: f32[64,32], index: 0, kind: input, shape index: {}]
  %s1 = inlined_call_operand.vmem [shape: f32[32,384], index: 1, kind: input, shape index: {}]
  %s2 = inlined_call_operand.hbm [shape: f32[128,384], index: 2, kind: input, shape index: {}]
  %s3 = inlined_call_operand.vmem [shape: f32[1,384], index: 3, kind: input, shape index: {}]
  %s4 = inlined_call_operand.vmem [shape: f32[1,128], index: 4, kind: input, shape index: {}]
  %s5 = inlined_call_operand.vmem [shape: f32[8,128], index: 5, kind: output, shape index: {}]
  %s6 = sld [smem:[#allocation0]]
  $region34: #{_forward_impl.1} parent=0
    _
  %s8 = ssub.s32 1, %s6
  %s9 = scalar_select 0, %s8, %s6
  $region1: #{_forward_impl.1} parent=0
    #allocation3 [shape = 'u8[196608]{0}', space=vmem, size = 0x30000, scoped, tag = 'input window, operand 2, single buffered']
    #allocation4 [shape = 's32[1]{0}', space=sflag, size = 0x4, scoped, tag = 'scoped memory for _forward_impl.1']
    %10 = vsyncpa [#allocation4], 0
    // Predicated region
    $region2: #{_forward_impl.1} parent=1 // pred_check
      _
    $region3: #{_forward_impl.1} parent=1 // pred_check_branch
      %12 = sbr.rel (0) target = $region5
    $region4: #{_forward_impl.1} parent=1 // pred_region
      _
    $region5: #{_forward_impl.1} parent=1 // pred_fallthru
      _
    // Predicated region
    $region6: #{_forward_impl.1} parent=1 // pred_check
      _
    $region7: #{_forward_impl.1} parent=1 // pred_check_branch
      %14 = sbr.rel (0) target = $region9
    $region8: #{_forward_impl.1} parent=1 // pred_region
      _
    $region9: #{_forward_impl.1} parent=1 // pred_fallthru
      _
    // Predicated region
    $region10: #{_forward_impl.1} parent=1 // pred_check
      _
    $region11: #{_forward_impl.1} parent=1 // pred_check_branch
      %16 = sbr.rel (0) target = $region13
    $region12: #{_forward_impl.1} parent=1 // pred_region
      %18 = vsyncadd [#allocation4], 0
      %s19 = sshll.u32 %s2, 4
      %s20 = int_to_ptr.hbm [resolvable:$true] %s19
      %s21 = sshll.u32 [#allocation3], 4
      %s22 = int_to_ptr.vmem [resolvable:$true] %s21
      %27 = dma.hbm_to_vmem [thread:$0]  %s20, 6144, %s22, [#allocation4], 384, 384, 24
    $region13: #{_forward_impl.1} parent=1 // pred_fallthru
      _
    // Predicated region
    $region14: #{_forward_impl.1} parent=1 // pred_check
      _
    $region15: #{_forward_impl.1} parent=1 // pred_check_branch
      %29 = sbr.rel (0) target = $region17
    $region16: #{_forward_impl.1} parent=1 // pred_region
      _
    $region17: #{_forward_impl.1} parent=1 // pred_fallthru
      _
    // Predicated region
    $region18: #{_forward_impl.1} parent=1 // pred_check
      _
    $region19: #{_forward_impl.1} parent=1 // pred_check_branch
      %31 = sbr.rel (0) target = $region21
    $region20: #{_forward_impl.1} parent=1 // pred_region
      _
    $region21: #{_forward_impl.1} parent=1 // pred_fallthru
      _
    // Predicated region
    $region22: #{_forward_impl.1} parent=1 // pred_check
      _
    $region23: #{_forward_impl.1} parent=1 // pred_check_branch
      %33 = sbr.rel (0) target = $region25
    $region24: #{_forward_impl.1} parent=1 // pred_region
      %35 = dma.done [#allocation4], 6144
    $region25: #{_forward_impl.1} parent=1 // pred_fallthru
      _
    %v36 = vld [vmem:[%s0] sm:$0xff]
    %v37 = vld [vmem:[%s0 + $0x8] sm:$0xff]
    %v38 = vld [vmem:[%s0 + $0x10] sm:$0xff]
    %v39 = vld [vmem:[%s0 + $0x18] sm:$0xff]
    %v40 = vld [vmem:[%s0 + $0x20] sm:$0xff]
    %v41 = vld [vmem:[%s0 + $0x28] sm:$0xff]
    %v42 = vld [vmem:[%s0 + $0x30] sm:$0xff]
    %v43 = vld [vmem:[%s0 + $0x38] sm:$0xff]
    %v44 = vld [vmem:[%s1] sm:$0xff]
    %v45 = vld [vmem:[%s1 + $0x8] sm:$0xff]
    %v46 = vld [vmem:[%s1 + $0x10] sm:$0xff]
    %v47 = vld [vmem:[%s1 + $0x18] sm:$0xff]
    %v48 = vld [vmem:[%s1 + $0x20] sm:$0xff]
    %v49 = vld [vmem:[%s1 + $0x28] sm:$0xff]
    %v50 = vld [vmem:[%s1 + $0x30] sm:$0xff]
    %v51 = vld [vmem:[%s1 + $0x38] sm:$0xff]
    %v52 = vld [vmem:[%s1 + $0x40] sm:$0xff]
    %v53 = vld [vmem:[%s1 + $0x48] sm:$0xff]
    %v54 = vld [vmem:[%s1 + $0x50] sm:$0xff]
    %v55 = vld [vmem:[%s1 + $0x58] sm:$0xff]
    %v56 = vld [vmem:[%s3] sm:$0x7]
    %v58 = vperm.slane %v56, 0
    %v59 = vperm.slane %v56, 1
    %v60 = vperm.slane %v56, 2
    %vm64 = vcmask 261120
    %v66 = vsel %vm64, %v36, 0
    %v69 = vsel %vm64, %v37, 0
    %v72 = vsel %vm64, %v38, 0
    %v75 = vsel %vm64, %v39, 0
    %v78 = vsel %vm64, %v40, 0
    %v81 = vsel %vm64, %v41, 0
    %v84 = vsel %vm64, %v42, 0
    %v87 = vsel %vm64, %v43, 0
    %89 = vmatpush.msra.mxu0 0.0
    %90 = vmatpush.msra.mxu0 0.0
    %91 = vmatpush.msra.mxu0 0.0
    %92 = vmatpush.msra.mxu0 0.0
    %93 = vmatpush.msra.mxu0 0.0
    %94 = vmatpush.msra.mxu0 0.0
    %95 = vmatpush.msra.mxu0 0.0
    %96 = vmatpush.msra.mxu0 0.0
    %97 = vmatpush.msra.mxu0 0.0
    %98 = vmatpush.msra.mxu0 0.0
    %99 = vmatpush.msra.mxu0 0.0
    %100 = vmatpush.msra.mxu0 0.0
    %101 = vmatpush.msra.mxu0 %v53
    %102 = vmatpush.msra.mxu0 %v50
    %103 = vmatpush.msra.mxu0 %v47
    %104 = vmatpush.msra.mxu0 %v44
    %105 = vmatmul.f32.gmra.mxu0 %v66
    %v106 = vpop.f32.mrf.mxu0
    %v107 = vadd.f32 %v58, %v106
    %108 = vmatmul.f32.gmra.mxu0 %v69
    %v109 = vpop.f32.mrf.mxu0
    %v110 = vadd.f32 %v58, %v109
    %111 = vmatmul.f32.gmra.mxu0 %v72
    %v112 = vpop.f32.mrf.mxu0
    %v113 = vadd.f32 %v58, %v112
    %114 = vmatmul.f32.gmra.mxu0 %v75
    %v115 = vpop.f32.mrf.mxu0
    %v116 = vadd.f32 %v58, %v115
    %117 = vmatmul.f32.gmra.mxu0 %v78
    %v118 = vpop.f32.mrf.mxu0
    %v119 = vadd.f32 %v58, %v118
    %120 = vmatmul.f32.gmra.mxu0 %v81
    %v121 = vpop.f32.mrf.mxu0
    %v122 = vadd.f32 %v58, %v121
    %123 = vmatmul.f32.gmra.mxu0 %v84
    %v124 = vpop.f32.mrf.mxu0
    %v125 = vadd.f32 %v58, %v124
    %126 = vmatmul.f32.gmra.mxu0 %v87
    %v127 = vpop.f32.mrf.mxu0
    %v128 = vadd.f32 %v58, %v127
    %129 = vdwg.mxu0
    %130 = vmatpush.msra.mxu0 0.0
    %131 = vmatpush.msra.mxu0 0.0
    %132 = vmatpush.msra.mxu0 0.0
    %133 = vmatpush.msra.mxu0 0.0
    %134 = vmatpush.msra.mxu0 0.0
    %135 = vmatpush.msra.mxu0 0.0
    %136 = vmatpush.msra.mxu0 0.0
    %137 = vmatpush.msra.mxu0 0.0
    %138 = vmatpush.msra.mxu0 0.0
    %139 = vmatpush.msra.mxu0 0.0
    %140 = vmatpush.msra.mxu0 0.0
    %141 = vmatpush.msra.mxu0 0.0
    %142 = vmatpush.msra.mxu0 %v54
    %143 = vmatpush.msra.mxu0 %v51
    %144 = vmatpush.msra.mxu0 %v48
    %145 = vmatpush.msra.mxu0 %v45
    %146 = vmatmul.f32.gmra.mxu0 %v66
    %v147 = vpop.f32.mrf.mxu0
    %v148 = vadd.f32 %v59, %v147
    %149 = vmatmul.f32.gmra.mxu0 %v69
    %v150 = vpop.f32.mrf.mxu0
    %v151 = vadd.f32 %v59, %v150
    %152 = vmatmul.f32.gmra.mxu0 %v72
    %v153 = vpop.f32.mrf.mxu0
    %v154 = vadd.f32 %v59, %v153
    %155 = vmatmul.f32.gmra.mxu0 %v75
    %v156 = vpop.f32.mrf.mxu0
    %v157 = vadd.f32 %v59, %v156
    %158 = vmatmul.f32.gmra.mxu0 %v78
    %v159 = vpop.f32.mrf.mxu0
    %v160 = vadd.f32 %v59, %v159
    %161 = vmatmul.f32.gmra.mxu0 %v81
    %v162 = vpop.f32.mrf.mxu0
    %v163 = vadd.f32 %v59, %v162
    %164 = vmatmul.f32.gmra.mxu0 %v84
    %v165 = vpop.f32.mrf.mxu0
    %v166 = vadd.f32 %v59, %v165
    %167 = vmatmul.f32.gmra.mxu0 %v87
    %v168 = vpop.f32.mrf.mxu0
    %v169 = vadd.f32 %v59, %v168
    %170 = vdwg.mxu0
    %171 = vmatpush.msra.mxu0 0.0
    %172 = vmatpush.msra.mxu0 0.0
    %173 = vmatpush.msra.mxu0 0.0
    %174 = vmatpush.msra.mxu0 0.0
    %175 = vmatpush.msra.mxu0 0.0
    %176 = vmatpush.msra.mxu0 0.0
    %177 = vmatpush.msra.mxu0 0.0
    %178 = vmatpush.msra.mxu0 0.0
    %179 = vmatpush.msra.mxu0 0.0
    %180 = vmatpush.msra.mxu0 0.0
    %181 = vmatpush.msra.mxu0 0.0
    %182 = vmatpush.msra.mxu0 0.0
    %183 = vmatpush.msra.mxu0 %v55
    %184 = vmatpush.msra.mxu0 %v52
    %185 = vmatpush.msra.mxu0 %v49
    %186 = vmatpush.msra.mxu0 %v46
    %187 = vmatmul.f32.gmra.mxu0 %v66
    %v188 = vpop.f32.mrf.mxu0
    %v189 = vadd.f32 %v60, %v188
    %190 = vmatmul.f32.gmra.mxu0 %v69
    %v191 = vpop.f32.mrf.mxu0
    %v192 = vadd.f32 %v60, %v191
    %193 = vmatmul.f32.gmra.mxu0 %v72
    %v194 = vpop.f32.mrf.mxu0
    %v195 = vadd.f32 %v60, %v194
    %196 = vmatmul.f32.gmra.mxu0 %v75
    %v197 = vpop.f32.mrf.mxu0
    %v198 = vadd.f32 %v60, %v197
    %199 = vmatmul.f32.gmra.mxu0 %v78
    %v200 = vpop.f32.mrf.mxu0
    %v201 = vadd.f32 %v60, %v200
    %202 = vmatmul.f32.gmra.mxu0 %v81
    %v203 = vpop.f32.mrf.mxu0
    %v204 = vadd.f32 %v60, %v203
    %205 = vmatmul.f32.gmra.mxu0 %v84
    %v206 = vpop.f32.mrf.mxu0
    %v207 = vadd.f32 %v60, %v206
    %208 = vmatmul.f32.gmra.mxu0 %v87
    %v209 = vpop.f32.mrf.mxu0
    %v210 = vadd.f32 %v60, %v209
    %211 = vdwg.mxu0
    %212 = vst [vmem:[#allocation2] sm:$0xff] %v107
    %213 = vst [vmem:[#allocation2 + $0x8] sm:$0xff] %v148
    %214 = vst [vmem:[#allocation2 + $0x10] sm:$0xff] %v189
    %215 = vst [vmem:[#allocation2 + $0x18] sm:$0xff] %v110
    %216 = vst [vmem:[#allocation2 + $0x20] sm:$0xff] %v151
    %217 = vst [vmem:[#allocation2 + $0x28] sm:$0xff] %v192
    %218 = vst [vmem:[#allocation2 + $0x30] sm:$0xff] %v113
    %219 = vst [vmem:[#allocation2 + $0x38] sm:$0xff] %v154
    %220 = vst [vmem:[#allocation2 + $0x40] sm:$0xff] %v195
    %221 = vst [vmem:[#allocation2 + $0x48] sm:$0xff] %v116
    %222 = vst [vmem:[#allocation2 + $0x50] sm:$0xff] %v157
    %223 = vst [vmem:[#allocation2 + $0x58] sm:$0xff] %v198
    %224 = vst [vmem:[#allocation2 + $0x60] sm:$0xff] %v119
    %225 = vst [vmem:[#allocation2 + $0x68] sm:$0xff] %v160
    %226 = vst [vmem:[#allocation2 + $0x70] sm:$0xff] %v201
    %227 = vst [vmem:[#allocation2 + $0x78] sm:$0xff] %v122
    %228 = vst [vmem:[#allocation2 + $0x80] sm:$0xff] %v163
    %229 = vst [vmem:[#allocation2 + $0x88] sm:$0xff] %v204
    %230 = vst [vmem:[#allocation2 + $0x90] sm:$0xff] %v125
    %231 = vst [vmem:[#allocation2 + $0x98] sm:$0xff] %v166
    %232 = vst [vmem:[#allocation2 + $0xa0] sm:$0xff] %v207
    %233 = vst [vmem:[#allocation2 + $0xa8] sm:$0xff] %v128
    %234 = vst [vmem:[#allocation2 + $0xb0] sm:$0xff] %v169
    %235 = vst [vmem:[#allocation2 + $0xb8] sm:$0xff] %v210
    %v236 = vld [vmem:[#allocation3] sm:$0xff]
    %v237 = vld [vmem:[#allocation3 + $0x8] sm:$0xff]
    %v238 = vld [vmem:[#allocation3 + $0x10] sm:$0xff]
    %v239 = vld [vmem:[#allocation3 + $0x18] sm:$0xff]
    %v240 = vld [vmem:[#allocation3 + $0x20] sm:$0xff]
    %v241 = vld [vmem:[#allocation3 + $0x28] sm:$0xff]
    %v242 = vld [vmem:[#allocation3 + $0x30] sm:$0xff]
    %v243 = vld [vmem:[#allocation3 + $0x38] sm:$0xff]
    %v244 = vld [vmem:[#allocation3 + $0x40] sm:$0xff]
    %v245 = vld [vmem:[#allocation3 + $0x48] sm:$0xff]
    %v246 = vld [vmem:[#allocation3 + $0x50] sm:$0xff]
    %v247 = vld [vmem:[#allocation3 + $0x58] sm:$0xff]
    %v248 = vld [vmem:[#allocation3 + $0x60] sm:$0xff]
    %v249 = vld [vmem:[#allocation3 + $0x68] sm:$0xff]
    %v250 = vld [vmem:[#allocation3 + $0x70] sm:$0xff]
    %v251 = vld [vmem:[#allocation3 + $0x78] sm:$0xff]
    %v252 = vld [vmem:[#allocation3 + $0x80] sm:$0xff]
    %v253 = vld [vmem:[#allocation3 + $0x88] sm:$0xff]
    %v254 = vld [vmem:[#allocation3 + $0x90] sm:$0xff]
    %v255 = vld [vmem:[#allocation3 + $0x98] sm:$0xff]
    %v256 = vld [vmem:[#allocation3 + $0xa0] sm:$0xff]
    %v257 = vld [vmem:[#allocation3 + $0xa8] sm:$0xff]
    %v258 = vld [vmem:[#allocation3 + $0xb0] sm:$0xff]
    %v259 = vld [vmem:[#allocation3 + $0xb8] sm:$0xff]
    %v260 = vld [vmem:[#allocation3 + $0xc0] sm:$0xff]
    %v261 = vld [vmem:[#allocation3 + $0xc8] sm:$0xff]
    %v262 = vld [vmem:[#allocation3 + $0xd0] sm:$0xff]
    %v263 = vld [vmem:[#allocation3 + $0xd8] sm:$0xff]
    %v264 = vld [vmem:[#allocation3 + $0xe0] sm:$0xff]
    %v265 = vld [vmem:[#allocation3 + $0xe8] sm:$0xff]
    %v266 = vld [vmem:[#allocation3 + $0xf0] sm:$0xff]
    %v267 = vld [vmem:[#allocation3 + $0xf8] sm:$0xff]
    %v268 = vld [vmem:[#allocation3 + $0x100] sm:$0xff]
    %v269 = vld [vmem:[#allocation3 + $0x108] sm:$0xff]
    %v270 = vld [vmem:[#allocation3 + $0x110] sm:$0xff]
    %v271 = vld [vmem:[#allocation3 + $0x118] sm:$0xff]
    %v272 = vld [vmem:[#allocation3 + $0x120] sm:$0xff]
    %v273 = vld [vmem:[#allocation3 + $0x128] sm:$0xff]
    %v274 = vld [vmem:[#allocation3 + $0x130] sm:$0xff]
    %v275 = vld [vmem:[#allocation3 + $0x138] sm:$0xff]
    %v276 = vld [vmem:[#allocation3 + $0x140] sm:$0xff]
    %v277 = vld [vmem:[#allocation3 + $0x148] sm:$0xff]
    %v278 = vld [vmem:[#allocation3 + $0x150] sm:$0xff]
    %v279 = vld [vmem:[#allocation3 + $0x158] sm:$0xff]
    %v280 = vld [vmem:[#allocation3 + $0x160] sm:$0xff]
    %v281 = vld [vmem:[#allocation3 + $0x168] sm:$0xff]
    %v282 = vld [vmem:[#allocation3 + $0x170] sm:$0xff]
    %v283 = vld [vmem:[#allocation3 + $0x178] sm:$0xff]
    %v284 = vld [vmem:[%s4] sm:$0x1]
    %v286 = vperm.slane %v284, 0
    %v288 = vld [vmem:[#allocation2] sm:$0xff]
    %v289 = vld [vmem:[#allocation2 + $0x8] sm:$0xff]
    %v290 = vld [vmem:[#allocation2 + $0x10] sm:$0xff]
    %v291 = vxor.u32 %v288, 2147483648
    %v292 = vmul.f32 %v291, 1.442695
    %v293 = vpow.pop %v292
    %v294 = vadd.f32 %v293, 1.0
    %v295 = vrcp.pop %v294
    %v296 = vmul.f32 %v294, %v295
    %v297 = vsub.f32 1.0, %v296
    %v298 = vmul.f32 %v295, %v297
    %v299 = vadd.f32 %v295, %v298
    %vm300 = vweird.f32 %v294
    %vm301 = vweird.f32 %v295
    %vm302 = vmor %vm300, %vm301
    %v303 = vsel %vm302, %v295, %v299
    %v304 = vand.u32 2147483647, %v294
    %vm305 = vcmp.eq.f32.partialorder %v304, 8.507059e+37
    %v306 = vand.u32 %v294, 2147483648
    %v307 = vor.u32 1.1754944e-38, %v306
    %v308 = vsel %vm305, %v307, %v303
    %v309 = vmul.f32 1.0, %v308
    %v310 = vxor.u32 %v289, 2147483648
    %v311 = vmul.f32 %v310, 1.442695
    %v312 = vpow.pop %v311
    %v313 = vadd.f32 %v312, 1.0
    %v314 = vrcp.pop %v313
    %v315 = vmul.f32 %v313, %v314
    %v316 = vsub.f32 1.0, %v315
    %v317 = vmul.f32 %v314, %v316
    %v318 = vadd.f32 %v314, %v317
    %vm319 = vweird.f32 %v313
    %vm320 = vweird.f32 %v314
    %vm321 = vmor %vm319, %vm320
    %v322 = vsel %vm321, %v314, %v318
    %v323 = vand.u32 2147483647, %v313
    %vm324 = vcmp.eq.f32.partialorder %v323, 8.507059e+37
    %v325 = vand.u32 %v313, 2147483648
    %v326 = vor.u32 1.1754944e-38, %v325
    %v327 = vsel %vm324, %v326, %v322
    %v328 = vmul.f32 1.0, %v327
    %v329 = vmul.f32 %v309, %v286
    %v330 = vadd.f32 %v290, %v329
    %v331 = vtanh.pop %v330
    %v332 = vsub.f32 1.0, %v328
    %v333 = vmul.f32 %v332, %v331
    %s334 = smul.u32 1, 3
    %s335 = smul.addr %s334, 8
    %s336 = scalar_lea.vmem [#allocation2], %s335
    %v337 = vld [vmem:[%s336] sm:$0xff]
    %v338 = vld [vmem:[%s336 + $0x8] sm:$0xff]
    %v339 = vld [vmem:[%s336 + $0x10] sm:$0xff]
    %340 = vmatpush.msra.mxu0 %v281
    %341 = vmatpush.msra.mxu0 %v278
    %342 = vmatpush.msra.mxu0 %v275
    %343 = vmatpush.msra.mxu0 %v272
    %344 = vmatpush.msra.mxu0 %v269
    %345 = vmatpush.msra.mxu0 %v266
    %346 = vmatpush.msra.mxu0 %v263
    %347 = vmatpush.msra.mxu0 %v260
    %348 = vmatpush.msra.mxu0 %v257
    %349 = vmatpush.msra.mxu0 %v254
    %350 = vmatpush.msra.mxu0 %v251
    %351 = vmatpush.msra.mxu0 %v248
    %352 = vmatpush.msra.mxu0 %v245
    %353 = vmatpush.msra.mxu0 %v242
    %354 = vmatpush.msra.mxu0 %v239
    %355 = vmatpush.msra.mxu0 %v236
    %356 = vmatmul.f32.gmra.mxu0 %v333
    %v357 = vpop.f32.mrf.mxu0
    %v358 = vadd.f32 0.0, %v357
    %359 = vdwg.mxu0
    %360 = vmatpush.msra.mxu0 %v282
    %361 = vmatpush.msra.mxu0 %v279
    %362 = vmatpush.msra.mxu0 %v276
    %363 = vmatpush.msra.mxu0 %v273
    %364 = vmatpush.msra.mxu0 %v270
    %365 = vmatpush.msra.mxu0 %v267
    %366 = vmatpush.msra.mxu0 %v264
    %367 = vmatpush.msra.mxu0 %v261
    %368 = vmatpush.msra.mxu0 %v258
    %369 = vmatpush.msra.mxu0 %v255
    %370 = vmatpush.msra.mxu0 %v252
    %371 = vmatpush.msra.mxu0 %v249
    %372 = vmatpush.msra.mxu0 %v246
    %373 = vmatpush.msra.mxu0 %v243
    %374 = vmatpush.msra.mxu0 %v240
    %375 = vmatpush.msra.mxu0 %v237
    %376 = vmatmul.f32.gmra.mxu0 %v333
    %v377 = vpop.f32.mrf.mxu0
    %v378 = vadd.f32 0.0, %v377
    %379 = vdwg.mxu0
    %380 = vmatpush.msra.mxu0 %v283
    %381 = vmatpush.msra.mxu0 %v280
    %382 = vmatpush.msra.mxu0 %v277
    %383 = vmatpush.msra.mxu0 %v274
    %384 = vmatpush.msra.mxu0 %v271
    %385 = vmatpush.msra.mxu0 %v268
    %386 = vmatpush.msra.mxu0 %v265
    %387 = vmatpush.msra.mxu0 %v262
    %388 = vmatpush.msra.mxu0 %v259
    %389 = vmatpush.msra.mxu0 %v256
    %390 = vmatpush.msra.mxu0 %v253
    %391 = vmatpush.msra.mxu0 %v250
    %392 = vmatpush.msra.mxu0 %v247
    %393 = vmatpush.msra.mxu0 %v244
    %394 = vmatpush.msra.mxu0 %v241
    %395 = vmatpush.msra.mxu0 %v238
    %396 = vmatmul.f32.gmra.mxu0 %v333
    %v397 = vpop.f32.mrf.mxu0
    %v398 = vadd.f32 0.0, %v397
    %399 = vdwg.mxu0
    %v400 = vadd.f32 %v337, %v358
    %v401 = vxor.u32 %v400, 2147483648
    %v402 = vmul.f32 %v401, 1.442695
    %v403 = vpow.pop %v402
    %v404 = vadd.f32 %v403, 1.0
    %v405 = vrcp.pop %v404
    %v406 = vmul.f32 %v404, %v405
    %v407 = vsub.f32 1.0, %v406
    %v408 = vmul.f32 %v405, %v407
    %v409 = vadd.f32 %v405, %v408
    %vm410 = vweird.f32 %v404
    %vm411 = vweird.f32 %v405
    %vm412 = vmor %vm410, %vm411
    %v413 = vsel %vm412, %v405, %v409
    %v414 = vand.u32 2147483647, %v404
    %vm415 = vcmp.eq.f32.partialorder %v414, 8.507059e+37
    %v416 = vand.u32 %v404, 2147483648
    %v417 = vor.u32 1.1754944e-38, %v416
    %v418 = vsel %vm415, %v417, %v413
    %v419 = vmul.f32 1.0, %v418
    %v420 = vadd.f32 %v338, %v378
    %v421 = vxor.u32 %v420, 2147483648
    %v422 = vmul.f32 %v421, 1.442695
    %v423 = vpow.pop %v422
    %v424 = vadd.f32 %v423, 1.0
    %v425 = vrcp.pop %v424
    %v426 = vmul.f32 %v424, %v425
    %v427 = vsub.f32 1.0, %v426
    %v428 = vmul.f32 %v425, %v427
    %v429 = vadd.f32 %v425, %v428
    %vm430 = vweird.f32 %v424
    %vm431 = vweird.f32 %v425
    %vm432 = vmor %vm430, %vm431
    %v433 = vsel %vm432, %v425, %v429
    %v434 = vand.u32 2147483647, %v424
    %vm435 = vcmp.eq.f32.partialorder %v434, 8.507059e+37
    %v436 = vand.u32 %v424, 2147483648
    %v437 = vor.u32 1.1754944e-38, %v436
    %v438 = vsel %vm435, %v437, %v433
    %v439 = vmul.f32 1.0, %v438
    %v440 = vadd.f32 %v398, %v286
    %v441 = vmul.f32 %v419, %v440
    %v442 = vadd.f32 %v339, %v441
    %v443 = vtanh.pop %v442
    %v444 = vsub.f32 1.0, %v439
    %v445 = vmul.f32 %v444, %v443
    %v446 = vmul.f32 %v439, %v333
    %v447 = vadd.f32 %v445, %v446
    %s448 = smul.u32 2, 3
    %s449 = smul.addr %s448, 8
    %s450 = scalar_lea.vmem [#allocation2], %s449
    %v451 = vld [vmem:[%s450] sm:$0xff]
    %v452 = vld [vmem:[%s450 + $0x8] sm:$0xff]
    %v453 = vld [vmem:[%s450 + $0x10] sm:$0xff]
    %454 = vmatpush.msra.mxu0 %v281
    %455 = vmatpush.msra.mxu0 %v278
    %456 = vmatpush.msra.mxu0 %v275
    %457 = vmatpush.msra.mxu0 %v272
    %458 = vmatpush.msra.mxu0 %v269
    %459 = vmatpush.msra.mxu0 %v266
    %460 = vmatpush.msra.mxu0 %v263
    %461 = vmatpush.msra.mxu0 %v260
    %462 = vmatpush.msra.mxu0 %v257
    %463 = vmatpush.msra.mxu0 %v254
    %464 = vmatpush.msra.mxu0 %v251
    %465 = vmatpush.msra.mxu0 %v248
    %466 = vmatpush.msra.mxu0 %v245
    %467 = vmatpush.msra.mxu0 %v242
    %468 = vmatpush.msra.mxu0 %v239
    %469 = vmatpush.msra.mxu0 %v236
    %470 = vmatmul.f32.gmra.mxu0 %v447
    %v471 = vpop.f32.mrf.mxu0
    %v472 = vadd.f32 0.0, %v471
    %473 = vdwg.mxu0
    %474 = vmatpush.msra.mxu0 %v282
    %475 = vmatpush.msra.mxu0 %v279
    %476 = vmatpush.msra.mxu0 %v276
    %477 = vmatpush.msra.mxu0 %v273
    %478 = vmatpush.msra.mxu0 %v270
    %479 = vmatpush.msra.mxu0 %v267
    %480 = vmatpush.msra.mxu0 %v264
    %481 = vmatpush.msra.mxu0 %v261
    %482 = vmatpush.msra.mxu0 %v258
    %483 = vmatpush.msra.mxu0 %v255
    %484 = vmatpush.msra.mxu0 %v252
    %485 = vmatpush.msra.mxu0 %v249
    %486 = vmatpush.msra.mxu0 %v246
    %487 = vmatpush.msra.mxu0 %v243
    %488 = vmatpush.msra.mxu0 %v240
    %489 = vmatpush.msra.mxu0 %v237
    %490 = vmatmul.f32.gmra.mxu0 %v447
    %v491 = vpop.f32.mrf.mxu0
    %v492 = vadd.f32 0.0, %v491
    %493 = vdwg.mxu0
    %494 = vmatpush.msra.mxu0 %v283
    %495 = vmatpush.msra.mxu0 %v280
    %496 = vmatpush.msra.mxu0 %v277
    %497 = vmatpush.msra.mxu0 %v274
    %498 = vmatpush.msra.mxu0 %v271
    %499 = vmatpush.msra.mxu0 %v268
    %500 = vmatpush.msra.mxu0 %v265
    %501 = vmatpush.msra.mxu0 %v262
    %502 = vmatpush.msra.mxu0 %v259
    %503 = vmatpush.msra.mxu0 %v256
    %504 = vmatpush.msra.mxu0 %v253
    %505 = vmatpush.msra.mxu0 %v250
    %506 = vmatpush.msra.mxu0 %v247
    %507 = vmatpush.msra.mxu0 %v244
    %508 = vmatpush.msra.mxu0 %v241
    %509 = vmatpush.msra.mxu0 %v238
    %510 = vmatmul.f32.gmra.mxu0 %v447
    %v511 = vpop.f32.mrf.mxu0
    %v512 = vadd.f32 0.0, %v511
    %513 = vdwg.mxu0
    %v514 = vadd.f32 %v451, %v472
    %v515 = vxor.u32 %v514, 2147483648
    %v516 = vmul.f32 %v515, 1.442695
    %v517 = vpow.pop %v516
    %v518 = vadd.f32 %v517, 1.0
    %v519 = vrcp.pop %v518
    %v520 = vmul.f32 %v518, %v519
    %v521 = vsub.f32 1.0, %v520
    %v522 = vmul.f32 %v519, %v521
    %v523 = vadd.f32 %v519, %v522
    %vm524 = vweird.f32 %v518
    %vm525 = vweird.f32 %v519
    %vm526 = vmor %vm524, %vm525
    %v527 = vsel %vm526, %v519, %v523
    %v528 = vand.u32 2147483647, %v518
    %vm529 = vcmp.eq.f32.partialorder %v528, 8.507059e+37
    %v530 = vand.u32 %v518, 2147483648
    %v531 = vor.u32 1.1754944e-38, %v530
    %v532 = vsel %vm529, %v531, %v527
    %v533 = vmul.f32 1.0, %v532
    %v534 = vadd.f32 %v452, %v492
    %v535 = vxor.u32 %v534, 2147483648
    %v536 = vmul.f32 %v535, 1.442695
    %v537 = vpow.pop %v536
    %v538 = vadd.f32 %v537, 1.0
    %v539 = vrcp.pop %v538
    %v540 = vmul.f32 %v538, %v539
    %v541 = vsub.f32 1.0, %v540
    %v542 = vmul.f32 %v539, %v541
    %v543 = vadd.f32 %v539, %v542
    %vm544 = vweird.f32 %v538
    %vm545 = vweird.f32 %v539
    %vm546 = vmor %vm544, %vm545
    %v547 = vsel %vm546, %v539, %v543
    %v548 = vand.u32 2147483647, %v538
    %vm549 = vcmp.eq.f32.partialorder %v548, 8.507059e+37
    %v550 = vand.u32 %v538, 2147483648
    %v551 = vor.u32 1.1754944e-38, %v550
    %v552 = vsel %vm549, %v551, %v547
    %v553 = vmul.f32 1.0, %v552
    %v554 = vadd.f32 %v512, %v286
    %v555 = vmul.f32 %v533, %v554
    %v556 = vadd.f32 %v453, %v555
    %v557 = vtanh.pop %v556
    %v558 = vsub.f32 1.0, %v553
    %v559 = vmul.f32 %v558, %v557
    %v560 = vmul.f32 %v553, %v447
    %v561 = vadd.f32 %v559, %v560
    %s562 = smul.u32 3, 3
    %s563 = smul.addr %s562, 8
    %s564 = scalar_lea.vmem [#allocation2], %s563
    %v565 = vld [vmem:[%s564] sm:$0xff]
    %v566 = vld [vmem:[%s564 + $0x8] sm:$0xff]
    %v567 = vld [vmem:[%s564 + $0x10] sm:$0xff]
    %568 = vmatpush.msra.mxu0 %v281
    %569 = vmatpush.msra.mxu0 %v278
    %570 = vmatpush.msra.mxu0 %v275
    %571 = vmatpush.msra.mxu0 %v272
    %572 = vmatpush.msra.mxu0 %v269
    %573 = vmatpush.msra.mxu0 %v266
    %574 = vmatpush.msra.mxu0 %v263
    %575 = vmatpush.msra.mxu0 %v260
    %576 = vmatpush.msra.mxu0 %v257
    %577 = vmatpush.msra.mxu0 %v254
    %578 = vmatpush.msra.mxu0 %v251
    %579 = vmatpush.msra.mxu0 %v248
    %580 = vmatpush.msra.mxu0 %v245
    %581 = vmatpush.msra.mxu0 %v242
    %582 = vmatpush.msra.mxu0 %v239
    %583 = vmatpush.msra.mxu0 %v236
    %584 = vmatmul.f32.gmra.mxu0 %v561
    %v585 = vpop.f32.mrf.mxu0
    %v586 = vadd.f32 0.0, %v585
    %587 = vdwg.mxu0
    %588 = vmatpush.msra.mxu0 %v282
    %589 = vmatpush.msra.mxu0 %v279
    %590 = vmatpush.msra.mxu0 %v276
    %591 = vmatpush.msra.mxu0 %v273
    %592 = vmatpush.msra.mxu0 %v270
    %593 = vmatpush.msra.mxu0 %v267
    %594 = vmatpush.msra.mxu0 %v264
    %595 = vmatpush.msra.mxu0 %v261
    %596 = vmatpush.msra.mxu0 %v258
    %597 = vmatpush.msra.mxu0 %v255
    %598 = vmatpush.msra.mxu0 %v252
    %599 = vmatpush.msra.mxu0 %v249
    %600 = vmatpush.msra.mxu0 %v246
    %601 = vmatpush.msra.mxu0 %v243
    %602 = vmatpush.msra.mxu0 %v240
    %603 = vmatpush.msra.mxu0 %v237
    %604 = vmatmul.f32.gmra.mxu0 %v561
    %v605 = vpop.f32.mrf.mxu0
    %v606 = vadd.f32 0.0, %v605
    %607 = vdwg.mxu0
    %608 = vmatpush.msra.mxu0 %v283
    %609 = vmatpush.msra.mxu0 %v280
    %610 = vmatpush.msra.mxu0 %v277
    %611 = vmatpush.msra.mxu0 %v274
    %612 = vmatpush.msra.mxu0 %v271
    %613 = vmatpush.msra.mxu0 %v268
    %614 = vmatpush.msra.mxu0 %v265
    %615 = vmatpush.msra.mxu0 %v262
    %616 = vmatpush.msra.mxu0 %v259
    %617 = vmatpush.msra.mxu0 %v256
    %618 = vmatpush.msra.mxu0 %v253
    %619 = vmatpush.msra.mxu0 %v250
    %620 = vmatpush.msra.mxu0 %v247
    %621 = vmatpush.msra.mxu0 %v244
    %622 = vmatpush.msra.mxu0 %v241
    %623 = vmatpush.msra.mxu0 %v238
    %624 = vmatmul.f32.gmra.mxu0 %v561
    %v625 = vpop.f32.mrf.mxu0
    %v626 = vadd.f32 0.0, %v625
    %627 = vdwg.mxu0
    %v628 = vadd.f32 %v565, %v586
    %v629 = vxor.u32 %v628, 2147483648
    %v630 = vmul.f32 %v629, 1.442695
    %v631 = vpow.pop %v630
    %v632 = vadd.f32 %v631, 1.0
    %v633 = vrcp.pop %v632
    %v634 = vmul.f32 %v632, %v633
    %v635 = vsub.f32 1.0, %v634
    %v636 = vmul.f32 %v633, %v635
    %v637 = vadd.f32 %v633, %v636
    %vm638 = vweird.f32 %v632
    %vm639 = vweird.f32 %v633
    %vm640 = vmor %vm638, %vm639
    %v641 = vsel %vm640, %v633, %v637
    %v642 = vand.u32 2147483647, %v632
    %vm643 = vcmp.eq.f32.partialorder %v642, 8.507059e+37
    %v644 = vand.u32 %v632, 2147483648
    %v645 = vor.u32 1.1754944e-38, %v644
    %v646 = vsel %vm643, %v645, %v641
    %v647 = vmul.f32 1.0, %v646
    %v648 = vadd.f32 %v566, %v606
    %v649 = vxor.u32 %v648, 2147483648
    %v650 = vmul.f32 %v649, 1.442695
    %v651 = vpow.pop %v650
    %v652 = vadd.f32 %v651, 1.0
    %v653 = vrcp.pop %v652
    %v654 = vmul.f32 %v652, %v653
    %v655 = vsub.f32 1.0, %v654
    %v656 = vmul.f32 %v653, %v655
    %v657 = vadd.f32 %v653, %v656
    %vm658 = vweird.f32 %v652
    %vm659 = vweird.f32 %v653
    %vm660 = vmor %vm658, %vm659
    %v661 = vsel %vm660, %v653, %v657
    %v662 = vand.u32 2147483647, %v652
    %vm663 = vcmp.eq.f32.partialorder %v662, 8.507059e+37
    %v664 = vand.u32 %v652, 2147483648
    %v665 = vor.u32 1.1754944e-38, %v664
    %v666 = vsel %vm663, %v665, %v661
    %v667 = vmul.f32 1.0, %v666
    %v668 = vadd.f32 %v626, %v286
    %v669 = vmul.f32 %v647, %v668
    %v670 = vadd.f32 %v567, %v669
    %v671 = vtanh.pop %v670
    %v672 = vsub.f32 1.0, %v667
    %v673 = vmul.f32 %v672, %v671
    %v674 = vmul.f32 %v667, %v561
    %v675 = vadd.f32 %v673, %v674
    %s676 = smul.u32 4, 3
    %s677 = smul.addr %s676, 8
    %s678 = scalar_lea.vmem [#allocation2], %s677
    %v679 = vld [vmem:[%s678] sm:$0xff]
    %v680 = vld [vmem:[%s678 + $0x8] sm:$0xff]
    %v681 = vld [vmem:[%s678 + $0x10] sm:$0xff]
    %682 = vmatpush.msra.mxu0 %v281
    %683 = vmatpush.msra.mxu0 %v278
    %684 = vmatpush.msra.mxu0 %v275
    %685 = vmatpush.msra.mxu0 %v272
    %686 = vmatpush.msra.mxu0 %v269
    %687 = vmatpush.msra.mxu0 %v266
    %688 = vmatpush.msra.mxu0 %v263
    %689 = vmatpush.msra.mxu0 %v260
    %690 = vmatpush.msra.mxu0 %v257
    %691 = vmatpush.msra.mxu0 %v254
    %692 = vmatpush.msra.mxu0 %v251
    %693 = vmatpush.msra.mxu0 %v248
    %694 = vmatpush.msra.mxu0 %v245
    %695 = vmatpush.msra.mxu0 %v242
    %696 = vmatpush.msra.mxu0 %v239
    %697 = vmatpush.msra.mxu0 %v236
    %698 = vmatmul.f32.gmra.mxu0 %v675
    %v699 = vpop.f32.mrf.mxu0
    %v700 = vadd.f32 0.0, %v699
    %701 = vdwg.mxu0
    %702 = vmatpush.msra.mxu0 %v282
    %703 = vmatpush.msra.mxu0 %v279
    %704 = vmatpush.msra.mxu0 %v276
    %705 = vmatpush.msra.mxu0 %v273
    %706 = vmatpush.msra.mxu0 %v270
    %707 = vmatpush.msra.mxu0 %v267
    %708 = vmatpush.msra.mxu0 %v264
    %709 = vmatpush.msra.mxu0 %v261
    %710 = vmatpush.msra.mxu0 %v258
    %711 = vmatpush.msra.mxu0 %v255
    %712 = vmatpush.msra.mxu0 %v252
    %713 = vmatpush.msra.mxu0 %v249
    %714 = vmatpush.msra.mxu0 %v246
    %715 = vmatpush.msra.mxu0 %v243
    %716 = vmatpush.msra.mxu0 %v240
    %717 = vmatpush.msra.mxu0 %v237
    %718 = vmatmul.f32.gmra.mxu0 %v675
    %v719 = vpop.f32.mrf.mxu0
    %v720 = vadd.f32 0.0, %v719
    %721 = vdwg.mxu0
    %722 = vmatpush.msra.mxu0 %v283
    %723 = vmatpush.msra.mxu0 %v280
    %724 = vmatpush.msra.mxu0 %v277
    %725 = vmatpush.msra.mxu0 %v274
    %726 = vmatpush.msra.mxu0 %v271
    %727 = vmatpush.msra.mxu0 %v268
    %728 = vmatpush.msra.mxu0 %v265
    %729 = vmatpush.msra.mxu0 %v262
    %730 = vmatpush.msra.mxu0 %v259
    %731 = vmatpush.msra.mxu0 %v256
    %732 = vmatpush.msra.mxu0 %v253
    %733 = vmatpush.msra.mxu0 %v250
    %734 = vmatpush.msra.mxu0 %v247
    %735 = vmatpush.msra.mxu0 %v244
    %736 = vmatpush.msra.mxu0 %v241
    %737 = vmatpush.msra.mxu0 %v238
    %738 = vmatmul.f32.gmra.mxu0 %v675
    %v739 = vpop.f32.mrf.mxu0
    %v740 = vadd.f32 0.0, %v739
    %741 = vdwg.mxu0
    %v742 = vadd.f32 %v679, %v700
    %v743 = vxor.u32 %v742, 2147483648
    %v744 = vmul.f32 %v743, 1.442695
    %v745 = vpow.pop %v744
    %v746 = vadd.f32 %v745, 1.0
    %v747 = vrcp.pop %v746
    %v748 = vmul.f32 %v746, %v747
    %v749 = vsub.f32 1.0, %v748
    %v750 = vmul.f32 %v747, %v749
    %v751 = vadd.f32 %v747, %v750
    %vm752 = vweird.f32 %v746
    %vm753 = vweird.f32 %v747
    %vm754 = vmor %vm752, %vm753
    %v755 = vsel %vm754, %v747, %v751
    %v756 = vand.u32 2147483647, %v746
    %vm757 = vcmp.eq.f32.partialorder %v756, 8.507059e+37
    %v758 = vand.u32 %v746, 2147483648
    %v759 = vor.u32 1.1754944e-38, %v758
    %v760 = vsel %vm757, %v759, %v755
    %v761 = vmul.f32 1.0, %v760
    %v762 = vadd.f32 %v680, %v720
    %v763 = vxor.u32 %v762, 2147483648
    %v764 = vmul.f32 %v763, 1.442695
    %v765 = vpow.pop %v764
    %v766 = vadd.f32 %v765, 1.0
    %v767 = vrcp.pop %v766
    %v768 = vmul.f32 %v766, %v767
    %v769 = vsub.f32 1.0, %v768
    %v770 = vmul.f32 %v767, %v769
    %v771 = vadd.f32 %v767, %v770
    %vm772 = vweird.f32 %v766
    %vm773 = vweird.f32 %v767
    %vm774 = vmor %vm772, %vm773
    %v775 = vsel %vm774, %v767, %v771
    %v776 = vand.u32 2147483647, %v766
    %vm777 = vcmp.eq.f32.partialorder %v776, 8.507059e+37
    %v778 = vand.u32 %v766, 2147483648
    %v779 = vor.u32 1.1754944e-38, %v778
    %v780 = vsel %vm777, %v779, %v775
    %v781 = vmul.f32 1.0, %v780
    %v782 = vadd.f32 %v740, %v286
    %v783 = vmul.f32 %v761, %v782
    %v784 = vadd.f32 %v681, %v783
    %v785 = vtanh.pop %v784
    %v786 = vsub.f32 1.0, %v781
    %v787 = vmul.f32 %v786, %v785
    %v788 = vmul.f32 %v781, %v675
    %v789 = vadd.f32 %v787, %v788
    %s790 = smul.u32 5, 3
    %s791 = smul.addr %s790, 8
    %s792 = scalar_lea.vmem [#allocation2], %s791
    %v793 = vld [vmem:[%s792] sm:$0xff]
    %v794 = vld [vmem:[%s792 + $0x8] sm:$0xff]
    %v795 = vld [vmem:[%s792 + $0x10] sm:$0xff]
    %796 = vmatpush.msra.mxu0 %v281
    %797 = vmatpush.msra.mxu0 %v278
    %798 = vmatpush.msra.mxu0 %v275
    %799 = vmatpush.msra.mxu0 %v272
    %800 = vmatpush.msra.mxu0 %v269
    %801 = vmatpush.msra.mxu0 %v266
    %802 = vmatpush.msra.mxu0 %v263
    %803 = vmatpush.msra.mxu0 %v260
    %804 = vmatpush.msra.mxu0 %v257
    %805 = vmatpush.msra.mxu0 %v254
    %806 = vmatpush.msra.mxu0 %v251
    %807 = vmatpush.msra.mxu0 %v248
    %808 = vmatpush.msra.mxu0 %v245
    %809 = vmatpush.msra.mxu0 %v242
    %810 = vmatpush.msra.mxu0 %v239
    %811 = vmatpush.msra.mxu0 %v236
    %812 = vmatmul.f32.gmra.mxu0 %v789
    %v813 = vpop.f32.mrf.mxu0
    %v814 = vadd.f32 0.0, %v813
    %815 = vdwg.mxu0
    %816 = vmatpush.msra.mxu0 %v282
    %817 = vmatpush.msra.mxu0 %v279
    %818 = vmatpush.msra.mxu0 %v276
    %819 = vmatpush.msra.mxu0 %v273
    %820 = vmatpush.msra.mxu0 %v270
    %821 = vmatpush.msra.mxu0 %v267
    %822 = vmatpush.msra.mxu0 %v264
    %823 = vmatpush.msra.mxu0 %v261
    %824 = vmatpush.msra.mxu0 %v258
    %825 = vmatpush.msra.mxu0 %v255
    %826 = vmatpush.msra.mxu0 %v252
    %827 = vmatpush.msra.mxu0 %v249
    %828 = vmatpush.msra.mxu0 %v246
    %829 = vmatpush.msra.mxu0 %v243
    %830 = vmatpush.msra.mxu0 %v240
    %831 = vmatpush.msra.mxu0 %v237
    %832 = vmatmul.f32.gmra.mxu0 %v789
    %v833 = vpop.f32.mrf.mxu0
    %v834 = vadd.f32 0.0, %v833
    %835 = vdwg.mxu0
    %836 = vmatpush.msra.mxu0 %v283
    %837 = vmatpush.msra.mxu0 %v280
    %838 = vmatpush.msra.mxu0 %v277
    %839 = vmatpush.msra.mxu0 %v274
    %840 = vmatpush.msra.mxu0 %v271
    %841 = vmatpush.msra.mxu0 %v268
    %842 = vmatpush.msra.mxu0 %v265
    %843 = vmatpush.msra.mxu0 %v262
    %844 = vmatpush.msra.mxu0 %v259
    %845 = vmatpush.msra.mxu0 %v256
    %846 = vmatpush.msra.mxu0 %v253
    %847 = vmatpush.msra.mxu0 %v250
    %848 = vmatpush.msra.mxu0 %v247
    %849 = vmatpush.msra.mxu0 %v244
    %850 = vmatpush.msra.mxu0 %v241
    %851 = vmatpush.msra.mxu0 %v238
    %852 = vmatmul.f32.gmra.mxu0 %v789
    %v853 = vpop.f32.mrf.mxu0
    %v854 = vadd.f32 0.0, %v853
    %855 = vdwg.mxu0
    %v856 = vadd.f32 %v793, %v814
    %v857 = vxor.u32 %v856, 2147483648
    %v858 = vmul.f32 %v857, 1.442695
    %v859 = vpow.pop %v858
    %v860 = vadd.f32 %v859, 1.0
    %v861 = vrcp.pop %v860
    %v862 = vmul.f32 %v860, %v861
    %v863 = vsub.f32 1.0, %v862
    %v864 = vmul.f32 %v861, %v863
    %v865 = vadd.f32 %v861, %v864
    %vm866 = vweird.f32 %v860
    %vm867 = vweird.f32 %v861
    %vm868 = vmor %vm866, %vm867
    %v869 = vsel %vm868, %v861, %v865
    %v870 = vand.u32 2147483647, %v860
    %vm871 = vcmp.eq.f32.partialorder %v870, 8.507059e+37
    %v872 = vand.u32 %v860, 2147483648
    %v873 = vor.u32 1.1754944e-38, %v872
    %v874 = vsel %vm871, %v873, %v869
    %v875 = vmul.f32 1.0, %v874
    %v876 = vadd.f32 %v794, %v834
    %v877 = vxor.u32 %v876, 2147483648
    %v878 = vmul.f32 %v877, 1.442695
    %v879 = vpow.pop %v878
    %v880 = vadd.f32 %v879, 1.0
    %v881 = vrcp.pop %v880
    %v882 = vmul.f32 %v880, %v881
    %v883 = vsub.f32 1.0, %v882
    %v884 = vmul.f32 %v881, %v883
    %v885 = vadd.f32 %v881, %v884
    %vm886 = vweird.f32 %v880
    %vm887 = vweird.f32 %v881
    %vm888 = vmor %vm886, %vm887
    %v889 = vsel %vm888, %v881, %v885
    %v890 = vand.u32 2147483647, %v880
    %vm891 = vcmp.eq.f32.partialorder %v890, 8.507059e+37
    %v892 = vand.u32 %v880, 2147483648
    %v893 = vor.u32 1.1754944e-38, %v892
    %v894 = vsel %vm891, %v893, %v889
    %v895 = vmul.f32 1.0, %v894
    %v896 = vadd.f32 %v854, %v286
    %v897 = vmul.f32 %v875, %v896
    %v898 = vadd.f32 %v795, %v897
    %v899 = vtanh.pop %v898
    %v900 = vsub.f32 1.0, %v895
    %v901 = vmul.f32 %v900, %v899
    %v902 = vmul.f32 %v895, %v789
    %v903 = vadd.f32 %v901, %v902
    %s904 = smul.u32 6, 3
    %s905 = smul.addr %s904, 8
    %s906 = scalar_lea.vmem [#allocation2], %s905
    %v907 = vld [vmem:[%s906] sm:$0xff]
    %v908 = vld [vmem:[%s906 + $0x8] sm:$0xff]
    %v909 = vld [vmem:[%s906 + $0x10] sm:$0xff]
    %910 = vmatpush.msra.mxu0 %v281
    %911 = vmatpush.msra.mxu0 %v278
    %912 = vmatpush.msra.mxu0 %v275
    %913 = vmatpush.msra.mxu0 %v272
    %914 = vmatpush.msra.mxu0 %v269
    %915 = vmatpush.msra.mxu0 %v266
    %916 = vmatpush.msra.mxu0 %v263
    %917 = vmatpush.msra.mxu0 %v260
    %918 = vmatpush.msra.mxu0 %v257
    %919 = vmatpush.msra.mxu0 %v254
    %920 = vmatpush.msra.mxu0 %v251
    %921 = vmatpush.msra.mxu0 %v248
    %922 = vmatpush.msra.mxu0 %v245
    %923 = vmatpush.msra.mxu0 %v242
    %924 = vmatpush.msra.mxu0 %v239
    %925 = vmatpush.msra.mxu0 %v236
    %926 = vmatmul.f32.gmra.mxu0 %v903
    %v927 = vpop.f32.mrf.mxu0
    %v928 = vadd.f32 0.0, %v927
    %929 = vdwg.mxu0
    %930 = vmatpush.msra.mxu0 %v282
    %931 = vmatpush.msra.mxu0 %v279
    %932 = vmatpush.msra.mxu0 %v276
    %933 = vmatpush.msra.mxu0 %v273
    %934 = vmatpush.msra.mxu0 %v270
    %935 = vmatpush.msra.mxu0 %v267
    %936 = vmatpush.msra.mxu0 %v264
    %937 = vmatpush.msra.mxu0 %v261
    %938 = vmatpush.msra.mxu0 %v258
    %939 = vmatpush.msra.mxu0 %v255
    %940 = vmatpush.msra.mxu0 %v252
    %941 = vmatpush.msra.mxu0 %v249
    %942 = vmatpush.msra.mxu0 %v246
    %943 = vmatpush.msra.mxu0 %v243
    %944 = vmatpush.msra.mxu0 %v240
    %945 = vmatpush.msra.mxu0 %v237
    %946 = vmatmul.f32.gmra.mxu0 %v903
    %v947 = vpop.f32.mrf.mxu0
    %v948 = vadd.f32 0.0, %v947
    %949 = vdwg.mxu0
    %950 = vmatpush.msra.mxu0 %v283
    %951 = vmatpush.msra.mxu0 %v280
    %952 = vmatpush.msra.mxu0 %v277
    %953 = vmatpush.msra.mxu0 %v274
    %954 = vmatpush.msra.mxu0 %v271
    %955 = vmatpush.msra.mxu0 %v268
    %956 = vmatpush.msra.mxu0 %v265
    %957 = vmatpush.msra.mxu0 %v262
    %958 = vmatpush.msra.mxu0 %v259
    %959 = vmatpush.msra.mxu0 %v256
    %960 = vmatpush.msra.mxu0 %v253
    %961 = vmatpush.msra.mxu0 %v250
    %962 = vmatpush.msra.mxu0 %v247
    %963 = vmatpush.msra.mxu0 %v244
    %964 = vmatpush.msra.mxu0 %v241
    %965 = vmatpush.msra.mxu0 %v238
    %966 = vmatmul.f32.gmra.mxu0 %v903
    %v967 = vpop.f32.mrf.mxu0
    %v968 = vadd.f32 0.0, %v967
    %969 = vdwg.mxu0
    %v970 = vadd.f32 %v907, %v928
    %v971 = vxor.u32 %v970, 2147483648
    %v972 = vmul.f32 %v971, 1.442695
    %v973 = vpow.pop %v972
    %v974 = vadd.f32 %v973, 1.0
    %v975 = vrcp.pop %v974
    %v976 = vmul.f32 %v974, %v975
    %v977 = vsub.f32 1.0, %v976
    %v978 = vmul.f32 %v975, %v977
    %v979 = vadd.f32 %v975, %v978
    %vm980 = vweird.f32 %v974
    %vm981 = vweird.f32 %v975
    %vm982 = vmor %vm980, %vm981
    %v983 = vsel %vm982, %v975, %v979
    %v984 = vand.u32 2147483647, %v974
    %vm985 = vcmp.eq.f32.partialorder %v984, 8.507059e+37
    %v986 = vand.u32 %v974, 2147483648
    %v987 = vor.u32 1.1754944e-38, %v986
    %v988 = vsel %vm985, %v987, %v983
    %v989 = vmul.f32 1.0, %v988
    %v990 = vadd.f32 %v908, %v948
    %v991 = vxor.u32 %v990, 2147483648
    %v992 = vmul.f32 %v991, 1.442695
    %v993 = vpow.pop %v992
    %v994 = vadd.f32 %v993, 1.0
    %v995 = vrcp.pop %v994
    %v996 = vmul.f32 %v994, %v995
    %v997 = vsub.f32 1.0, %v996
    %v998 = vmul.f32 %v995, %v997
    %v999 = vadd.f32 %v995, %v998
    %vm1000 = vweird.f32 %v994
    %vm1001 = vweird.f32 %v995
    %vm1002 = vmor %vm1000, %vm1001
    %v1003 = vsel %vm1002, %v995, %v999
    %v1004 = vand.u32 2147483647, %v994
    %vm1005 = vcmp.eq.f32.partialorder %v1004, 8.507059e+37
    %v1006 = vand.u32 %v994, 2147483648
    %v1007 = vor.u32 1.1754944e-38, %v1006
    %v1008 = vsel %vm1005, %v1007, %v1003
    %v1009 = vmul.f32 1.0, %v1008
    %v1010 = vadd.f32 %v968, %v286
    %v1011 = vmul.f32 %v989, %v1010
    %v1012 = vadd.f32 %v909, %v1011
    %v1013 = vtanh.pop %v1012
    %v1014 = vsub.f32 1.0, %v1009
    %v1015 = vmul.f32 %v1014, %v1013
    %v1016 = vmul.f32 %v1009, %v903
    %v1017 = vadd.f32 %v1015, %v1016
    %s1018 = smul.u32 7, 3
    %s1019 = smul.addr %s1018, 8
    %s1020 = scalar_lea.vmem [#allocation2], %s1019
    %v1021 = vld [vmem:[%s1020] sm:$0xff]
    %v1022 = vld [vmem:[%s1020 + $0x8] sm:$0xff]
    %v1023 = vld [vmem:[%s1020 + $0x10] sm:$0xff]
    %1024 = vmatpush.msra.mxu0 %v281
    %1025 = vmatpush.msra.mxu0 %v278
    %1026 = vmatpush.msra.mxu0 %v275
    %1027 = vmatpush.msra.mxu0 %v272
    %1028 = vmatpush.msra.mxu0 %v269
    %1029 = vmatpush.msra.mxu0 %v266
    %1030 = vmatpush.msra.mxu0 %v263
    %1031 = vmatpush.msra.mxu0 %v260
    %1032 = vmatpush.msra.mxu0 %v257
    %1033 = vmatpush.msra.mxu0 %v254
    %1034 = vmatpush.msra.mxu0 %v251
    %1035 = vmatpush.msra.mxu0 %v248
    %1036 = vmatpush.msra.mxu0 %v245
    %1037 = vmatpush.msra.mxu0 %v242
    %1038 = vmatpush.msra.mxu0 %v239
    %1039 = vmatpush.msra.mxu0 %v236
    %1040 = vmatmul.f32.gmra.mxu0 %v1017
    %v1041 = vpop.f32.mrf.mxu0
    %v1042 = vadd.f32 0.0, %v1041
    %1043 = vdwg.mxu0
    %1044 = vmatpush.msra.mxu0 %v282
    %1045 = vmatpush.msra.mxu0 %v279
    %1046 = vmatpush.msra.mxu0 %v276
    %1047 = vmatpush.msra.mxu0 %v273
    %1048 = vmatpush.msra.mxu0 %v270
    %1049 = vmatpush.msra.mxu0 %v267
    %1050 = vmatpush.msra.mxu0 %v264
    %1051 = vmatpush.msra.mxu0 %v261
    %1052 = vmatpush.msra.mxu0 %v258
    %1053 = vmatpush.msra.mxu0 %v255
    %1054 = vmatpush.msra.mxu0 %v252
    %1055 = vmatpush.msra.mxu0 %v249
    %1056 = vmatpush.msra.mxu0 %v246
    %1057 = vmatpush.msra.mxu0 %v243
    %1058 = vmatpush.msra.mxu0 %v240
    %1059 = vmatpush.msra.mxu0 %v237
    %1060 = vmatmul.f32.gmra.mxu0 %v1017
    %v1061 = vpop.f32.mrf.mxu0
    %v1062 = vadd.f32 0.0, %v1061
    %1063 = vdwg.mxu0
    %1064 = vmatpush.msra.mxu0 %v283
    %1065 = vmatpush.msra.mxu0 %v280
    %1066 = vmatpush.msra.mxu0 %v277
    %1067 = vmatpush.msra.mxu0 %v274
    %1068 = vmatpush.msra.mxu0 %v271
    %1069 = vmatpush.msra.mxu0 %v268
    %1070 = vmatpush.msra.mxu0 %v265
    %1071 = vmatpush.msra.mxu0 %v262
    %1072 = vmatpush.msra.mxu0 %v259
    %1073 = vmatpush.msra.mxu0 %v256
    %1074 = vmatpush.msra.mxu0 %v253
    %1075 = vmatpush.msra.mxu0 %v250
    %1076 = vmatpush.msra.mxu0 %v247
    %1077 = vmatpush.msra.mxu0 %v244
    %1078 = vmatpush.msra.mxu0 %v241
    %1079 = vmatpush.msra.mxu0 %v238
    %1080 = vmatmul.f32.gmra.mxu0 %v1017
    %v1081 = vpop.f32.mrf.mxu0
    %v1082 = vadd.f32 0.0, %v1081
    %1083 = vdwg.mxu0
    %v1084 = vadd.f32 %v1021, %v1042
    %v1085 = vxor.u32 %v1084, 2147483648
    %v1086 = vmul.f32 %v1085, 1.442695
    %v1087 = vpow.pop %v1086
    %v1088 = vadd.f32 %v1087, 1.0
    %v1089 = vrcp.pop %v1088
    %v1090 = vmul.f32 %v1088, %v1089
    %v1091 = vsub.f32 1.0, %v1090
    %v1092 = vmul.f32 %v1089, %v1091
    %v1093 = vadd.f32 %v1089, %v1092
    %vm1094 = vweird.f32 %v1088
    %vm1095 = vweird.f32 %v1089
    %vm1096 = vmor %vm1094, %vm1095
    %v1097 = vsel %vm1096, %v1089, %v1093
    %v1098 = vand.u32 2147483647, %v1088
    %vm1099 = vcmp.eq.f32.partialorder %v1098, 8.507059e+37
    %v1100 = vand.u32 %v1088, 2147483648
    %v1101 = vor.u32 1.1754944e-38, %v1100
    %v1102 = vsel %vm1099, %v1101, %v1097
    %v1103 = vmul.f32 1.0, %v1102
    %v1104 = vadd.f32 %v1022, %v1062
    %v1105 = vxor.u32 %v1104, 2147483648
    %v1106 = vmul.f32 %v1105, 1.442695
    %v1107 = vpow.pop %v1106
    %v1108 = vadd.f32 %v1107, 1.0
    %v1109 = vrcp.pop %v1108
    %v1110 = vmul.f32 %v1108, %v1109
    %v1111 = vsub.f32 1.0, %v1110
    %v1112 = vmul.f32 %v1109, %v1111
    %v1113 = vadd.f32 %v1109, %v1112
    %vm1114 = vweird.f32 %v1108
    %vm1115 = vweird.f32 %v1109
    %vm1116 = vmor %vm1114, %vm1115
    %v1117 = vsel %vm1116, %v1109, %v1113
    %v1118 = vand.u32 2147483647, %v1108
    %vm1119 = vcmp.eq.f32.partialorder %v1118, 8.507059e+37
    %v1120 = vand.u32 %v1108, 2147483648
    %v1121 = vor.u32 1.1754944e-38, %v1120
    %v1122 = vsel %vm1119, %v1121, %v1117
    %v1123 = vmul.f32 1.0, %v1122
    %v1124 = vadd.f32 %v1082, %v286
    %v1125 = vmul.f32 %v1103, %v1124
    %v1126 = vadd.f32 %v1023, %v1125
    %v1127 = vtanh.pop %v1126
    %v1128 = vsub.f32 1.0, %v1123
    %v1129 = vmul.f32 %v1128, %v1127
    %v1130 = vmul.f32 %v1123, %v1017
    %v1131 = vadd.f32 %v1129, %v1130
    %1132 = vst [vmem:[%s5] sm:$0xff] %v1131
    // Predicated region
    $region26: #{_forward_impl.1} parent=1 // pred_check
      _
    $region27: #{_forward_impl.1} parent=1 // pred_check_branch
      %1134 = sbr.rel (0) target = $region29
    $region28: #{_forward_impl.1} parent=1 // pred_region
      _
    $region29: #{_forward_impl.1} parent=1 // pred_fallthru
      _
    // Predicated region
    $region30: #{_forward_impl.1} parent=1 // pred_check
      _
    $region31: #{_forward_impl.1} parent=1 // pred_check_branch
      %1136 = sbr.rel (0) target = $region33
    $region32: #{_forward_impl.1} parent=1 // pred_region
      _
    $region33: #{_forward_impl.1} parent=1 // pred_fallthru
      _
    %1137 = vsyncpa [#allocation4], 1

</llo_original>
